<compile_context>
chip_gen: v6e
topology: v6e:2x2x1
jax: 0.10.0
libtpu: 0.0.40
codegen_flags: <defaults>
</compile_context>

<pallas_src>
import jax
import jax.numpy as jnp
from jax.experimental import pallas as pl
from jax.experimental.pallas import tpu as pltpu

HIDDEN = 64
N_PRIM = 4            # number of 64x64 "prim" layers (layers 2..5)
SMALL_W = 24          # packed rank-1/scalar slab width (18 used + 6 pad)


def _round_up(n, m):
    return ((n + m - 1) // m) * m


# ---------------------------------------------------------------------------
# Kernel
# ---------------------------------------------------------------------------
def icnn_kernel(x_ref, small_ref, wp_ref, out_ref):
    """One batch tile.

    x_ref:     [1, BT]      f32   batch-on-lanes input
    small_ref: [64, 24]     f32   packed rank-1/scalar params (see _pack_params)
    wp_ref:    [4, 64, 64]  bf16  stacked prim weights (torch [out, in] layout)
    out_ref:   [1, BT]      f32
    """
    x = x_ref[...]                                          # [1, BT]
    bt = x.shape[1]
    small = small_ref[...]                                  # [64, 24] f32

    def col(c):
        return small[:, c:c + 1]                            # [64, 1] static slice

    # Hoisted once, reused by the first layer and all four skips.
    xb = jnp.broadcast_to(x, (HIDDEN, bt))                  # [64, BT]

    # first_hidden_layer: Linear(1, 64) + ReLU  (rank-1 VPU work, no MXU)
    z = jnp.maximum(col(0) * xb + col(1), 0.0)              # [64, BT] f32

    for i in range(N_PRIM):
        bp = col(2 + 3 * i)
        ws = col(3 + 3 * i)
        bs = col(4 + 3 * i)
        # prim Linear(64, 64): single-pass bf16 MXU matmul, f32 accumulation
        zp = jnp.dot(wp_ref[i], z.astype(jnp.bfloat16),
                     preferred_element_type=jnp.float32)    # [64, BT] f32
        zp = jnp.maximum(zp + bp, 0.0)                      # clamp(min=0)
        # skip Linear(1, 64): VPU broadcast outer product (co-issues under MXU)
        ys = ws * xb + bs                                   # [64, BT]
        z = jnp.maximum(zp + ys, 0.0)                       # ReLU

    # output prim Linear(64, 1) with clamp(max=0): N=1 matmul avoided ->
    # f32 VPU multiply + sublane reduction, result stays lane-dense [1, BT].
    zo = jnp.sum(z * col(14), axis=0, keepdims=True) + small[0:1, 15:16]
    zo = jnp.minimum(zo, 0.0)                               # clamp(max=0)
    # output skip Linear(1, 1)
    yo = small[0:1, 16:17] * x + small[0:1, 17:18]
    out_ref[...] = zo + yo                                  # lane-dense store


# ---------------------------------------------------------------------------
# Parameter packing + wrapper
# ---------------------------------------------------------------------------
def _pack_params(params):
    """21 torch-layout params -> (small [64,24] f32, wp [4,64,64] bf16)."""
    (w1, b1,
     wp2, bp2, ws2, bs2,
     wp3, bp3, ws3, bs3,
     wp4, bp4, ws4, bs4,
     wp5, bp5, ws5, bs5,
     wo, bo, wso, bso) = params
    ones = jnp.ones((HIDDEN, 1), jnp.float32)
    cols = [w1, b1,                                   # cols 0, 1
            bp2, ws2, bs2,                            # cols 2..4
            bp3, ws3, bs3,                            # cols 5..7
            bp4, ws4, bs4,                            # cols 8..10
            bp5, ws5, bs5,                            # cols 11..13
            wo,                                       # col 14
            bo[0, 0] * ones,                          # col 15 (scalar, replicated)
            wso[0, 0] * ones,                         # col 16
            bso[0, 0] * ones,                         # col 17
            jnp.zeros((HIDDEN, SMALL_W - 18), jnp.float32)]
    small = jnp.concatenate(cols, axis=1).astype(jnp.float32)      # [64, 24]
    wp = jnp.stack([wp2, wp3, wp4, wp5]).astype(jnp.bfloat16)      # [4, 64, 64]
    return small, wp


def icnn_forward(x, params, *, block_b=2048):
    """x: [B, 1] float32. params: flat 21-tuple (see init_params). Returns [B, 1]."""
    B = x.shape[0]

    # Batch tile: 256-aligned, large to amortize per-grid-step overhead, capped
    # near ceil(B/2) so v7x gets >= 2 grid steps for its two TensorCores.
    bb = min(block_b, _round_up(pl.cdiv(B, 2), 256))
    bb = max(256, _round_up(bb, 256))
    nb = pl.cdiv(B, bb)
    b_pad = nb * bb

    small, wp = _pack_params(params)

    # Lane-dense presentation of x: [B, 1] -> [1, B_pad].
    xr = x.reshape(1, B)
    if b_pad != B:
        xr = jnp.pad(xr, ((0, 0), (0, b_pad - B)))

    x_spec = pl.BlockSpec((1, bb), lambda i: (0, i))
    # Constant index_maps: parameter slabs stay resident in VMEM across steps.
    small_spec = pl.BlockSpec((HIDDEN, SMALL_W), lambda i: (0, 0))
    wp_spec = pl.BlockSpec((N_PRIM, HIDDEN, HIDDEN), lambda i: (0, 0, 0))
    out_spec = pl.BlockSpec((1, bb), lambda i: (0, i))

    out = pl.pallas_call(
        icnn_kernel,
        out_shape=jax.ShapeDtypeStruct((1, b_pad), jnp.float32),
        grid=(nb,),
        in_specs=[x_spec, small_spec, wp_spec],
        out_specs=out_spec,
        compiler_params=pltpu.CompilerParams(
            dimension_semantics=("parallel",)),   # megacore batch sharding on v7x
    )(xr, small, wp)

    return out[:, :B].reshape(B, 1)


# ---------------------------------------------------------------------------
# Init (PyTorch nn.Linear-equivalent) and references
# ---------------------------------------------------------------------------
def _linear_init(key, fan_in, fan_out):
    """PyTorch nn.Linear default init: U(-1/sqrt(fan_in), 1/sqrt(fan_in))."""
    kw, kb = jax.random.split(key)
    bound = 1.0 / float(fan_in) ** 0.5
    w = jax.random.uniform(kw, (fan_out, fan_in), jnp.float32, -bound, bound)
    b = jax.random.uniform(kb, (fan_out, 1), jnp.float32, -bound, bound)
    return w, b  # w: torch [out, in] layout; b: [out, 1] column


def init_params(key):
    keys = jax.random.split(key, 11)
    # first hidden layer: Linear(1, 64)
    w1, b1 = _linear_init(keys[0], 1, HIDDEN)          # [64,1], [64,1]
    params = [w1, b1]
    # layers 2..5: prim Linear(64, 64) with |W|, skip Linear(1, 64)
    for i in range(4):
        wp, bp = _linear_init(keys[1 + 2 * i], HIDDEN, HIDDEN)
        wp = jnp.abs(wp)                               # torch.abs on prim weights
        ws, bs = _linear_init(keys[2 + 2 * i], 1, HIDDEN)
        params += [wp, bp, ws, bs]
    # output: prim Linear(64, 1) with -|W| (stored as a [64,1] column), skip Linear(1, 1)
    wo_pt, bo = _linear_init(keys[9], HIDDEN, 1)       # [1,64], [1,1]
    wo = -jnp.abs(wo_pt).T                             # [64,1]
    wso, bso = _linear_init(keys[10], 1, 1)            # [1,1], [1,1]
    params += [wo, bo, wso, bso]
    return tuple(params)


def icnn_reference(x, params):
    """Pure-jnp full-f32 reference mirroring the PyTorch forward (x: [B, 1])."""
    (w1, b1,
     wp2, bp2, ws2, bs2,
     wp3, bp3, ws3, bs3,
     wp4, bp4, ws4, bs4,
     wp5, bp5, ws5, bs5,
     wo, bo, wso, bso) = params
    hp = jax.lax.Precision.HIGHEST
    z = jnp.maximum(x * w1.T + b1.T, 0.0)                             # [B, 64]
    for wp, bp, ws, bs in ((wp2, bp2, ws2, bs2), (wp3, bp3, ws3, bs3),
                           (wp4, bp4, ws4, bs4), (wp5, bp5, ws5, bs5)):
        zp = jnp.maximum(jnp.dot(z, wp.T, precision=hp) + bp.T, 0.0)  # clamp(min=0)
        z = jnp.maximum(zp + x * ws.T + bs.T, 0.0)                    # ReLU
    zo = jnp.minimum(jnp.dot(z, wo, precision=hp) + bo, 0.0)          # clamp(max=0)
    yo = x * wso + bso
    return zo + yo


def icnn_reference_bf16(x, params):
    """Precision-matched reference: bf16 prim matmuls w/ f32 accumulation, else f32."""
    (w1, b1,
     wp2, bp2, ws2, bs2,
     wp3, bp3, ws3, bs3,
     wp4, bp4, ws4, bs4,
     wp5, bp5, ws5, bs5,
     wo, bo, wso, bso) = params
    z = jnp.maximum(x * w1.T + b1.T, 0.0)                             # [B, 64]
    for wp, bp, ws, bs in ((wp2, bp2, ws2, bs2), (wp3, bp3, ws3, bs3),
                           (wp4, bp4, ws4, bs4), (wp5, bp5, ws5, bs5)):
        zp = jnp.dot(z.astype(jnp.bfloat16), wp.astype(jnp.bfloat16).T,
                     preferred_element_type=jnp.float32) + bp.T
        zp = jnp.maximum(zp, 0.0)
        z = jnp.maximum(zp + x * ws.T + bs.T, 0.0)
    zo = jnp.sum(z * wo.T, axis=1, keepdims=True) + bo                # f32, like kernel
    zo = jnp.minimum(zo, 0.0)
    yo = x * wso + bso
    return zo + yo


if __name__ == "__main__":
    key = jax.random.PRNGKey(0)
    k_params, k_x = jax.random.split(key)

    params = init_params(k_params)
    B = 777                                  # exercises padding + 2 grid steps
    x = jax.random.normal(k_x, (B, 1), jnp.float32)

    fwd = jax.jit(icnn_forward)
    out = jax.block_until_ready(fwd(x, params))
    assert out.shape == (B, 1), out.shape

    # Primary check: matches a jnp reference with the kernel's exact precision
    # policy (bf16 prim matmuls, f32 accumulate / elementwise).
    ref_matched = icnn_reference_bf16(x, params)
    assert jnp.allclose(out, ref_matched, rtol=1e-3, atol=1e-3)

    # Loose bound vs the full-f32 module semantics (bf16 matmul drift only).
    ref_f32 = icnn_reference(x, params)
    assert jnp.allclose(out, ref_f32, rtol=5e-2, atol=1e-1)

    print("KERNEL_OK")
</pallas_src>

<mosaic_0001>
module attributes {stable_mosaic.version = 11 : i64} {
  func.func @icnn_kernel(%arg0: i32, %arg1: memref<1x512xf32, #tpu.memory_space<vmem>>, %arg2: memref<64x24xf32, #tpu.memory_space<vmem>>, %arg3: memref<4x64x64xbf16, #tpu.memory_space<vmem>>, %arg4: memref<1x512xf32, #tpu.memory_space<vmem>>) attributes {dimension_semantics = [#tpu.dimension_semantics<parallel>], iteration_bounds = array<i64: 2>, scalar_prefetch = 0 : i64, scratch_operands = 0 : i64, tpu.core_type = #tpu.core_type<tc>, window_params = [{transform_indices = @transform_0, window_bounds = array<i64: 1, 512>}, {pipeline_mode = #tpu.pipeline_mode<synchronous>, transform_indices = @transform_1, window_bounds = array<i64: 64, 24>}, {pipeline_mode = #tpu.pipeline_mode<synchronous>, transform_indices = @transform_2, window_bounds = array<i64: 4, 64, 64>}, {transform_indices = @transform_3, window_bounds = array<i64: 1, 512>}]} {
    %c0 = arith.constant 0 : index
    %c0_0 = arith.constant 0 : index
    %0 = vector.load %arg1[%c0, %c0_0] : memref<1x512xf32, #tpu.memory_space<vmem>>, vector<1x512xf32>
    %c0_1 = arith.constant 0 : index
    %c0_2 = arith.constant 0 : index
    %1 = vector.load %arg2[%c0_1, %c0_2] : memref<64x24xf32, #tpu.memory_space<vmem>>, vector<64x24xf32>
    %2 = vector.shape_cast %0 : vector<1x512xf32> to vector<1x512xf32>
    %3 = vector.broadcast %2 : vector<1x512xf32> to vector<64x512xf32>
    %4 = vector.extract_strided_slice %1 {offsets = [0, 0], sizes = [64, 1], strides = [1, 1]} : vector<64x24xf32> to vector<64x1xf32>
    %5 = vector.broadcast %4 : vector<64x1xf32> to vector<64x512xf32>
    %6 = arith.mulf %5, %3 : vector<64x512xf32>
    %7 = vector.extract_strided_slice %1 {offsets = [0, 1], sizes = [64, 1], strides = [1, 1]} : vector<64x24xf32> to vector<64x1xf32>
    %8 = vector.broadcast %7 : vector<64x1xf32> to vector<64x512xf32>
    %9 = arith.addf %6, %8 : vector<64x512xf32>
    %cst = arith.constant 0.000000e+00 : f32
    %10 = vector.broadcast %cst : f32 to vector<64x512xf32>
    %11 = arith.maximumf %9, %10 : vector<64x512xf32>
    %12 = vector.extract_strided_slice %1 {offsets = [0, 2], sizes = [64, 1], strides = [1, 1]} : vector<64x24xf32> to vector<64x1xf32>
    %13 = vector.extract_strided_slice %1 {offsets = [0, 3], sizes = [64, 1], strides = [1, 1]} : vector<64x24xf32> to vector<64x1xf32>
    %14 = vector.extract_strided_slice %1 {offsets = [0, 4], sizes = [64, 1], strides = [1, 1]} : vector<64x24xf32> to vector<64x1xf32>
    %c0_3 = arith.constant 0 : index
    %c0_4 = arith.constant 0 : index
    %c0_5 = arith.constant 0 : index
    %15 = vector.load %arg3[%c0_3, %c0_4, %c0_5] : memref<4x64x64xbf16, #tpu.memory_space<vmem>>, vector<1x64x64xbf16>
    %16 = vector.shape_cast %15 : vector<1x64x64xbf16> to vector<64x64xbf16>
    %17 = arith.truncf %11 : vector<64x512xf32> to vector<64x512xbf16>
    %cst_6 = arith.constant dense<0.000000e+00> : vector<64x512xf32>
    %18 = tpu.matmul %16, %17, %cst_6 {dimension_numbers = #tpu.dot_dimension_numbers<[1], [0], [0], [1], [0, 0, 1, 1], [], []>} : vector<64x64xbf16>, vector<64x512xbf16>, vector<64x512xf32> -> vector<64x512xf32>
    %19 = vector.broadcast %12 : vector<64x1xf32> to vector<64x512xf32>
    %20 = arith.addf %18, %19 : vector<64x512xf32>
    %cst_7 = arith.constant 0.000000e+00 : f32
    %21 = vector.broadcast %cst_7 : f32 to vector<64x512xf32>
    %22 = arith.maximumf %20, %21 : vector<64x512xf32>
    %23 = vector.broadcast %13 : vector<64x1xf32> to vector<64x512xf32>
    %24 = arith.mulf %23, %3 : vector<64x512xf32>
    %25 = vector.broadcast %14 : vector<64x1xf32> to vector<64x512xf32>
    %26 = arith.addf %24, %25 : vector<64x512xf32>
    %27 = arith.addf %22, %26 : vector<64x512xf32>
    %cst_8 = arith.constant 0.000000e+00 : f32
    %28 = vector.broadcast %cst_8 : f32 to vector<64x512xf32>
    %29 = arith.maximumf %27, %28 : vector<64x512xf32>
    %30 = vector.extract_strided_slice %1 {offsets = [0, 5], sizes = [64, 1], strides = [1, 1]} : vector<64x24xf32> to vector<64x1xf32>
    %31 = vector.extract_strided_slice %1 {offsets = [0, 6], sizes = [64, 1], strides = [1, 1]} : vector<64x24xf32> to vector<64x1xf32>
    %32 = vector.extract_strided_slice %1 {offsets = [0, 7], sizes = [64, 1], strides = [1, 1]} : vector<64x24xf32> to vector<64x1xf32>
    %c1 = arith.constant 1 : index
    %c0_9 = arith.constant 0 : index
    %c0_10 = arith.constant 0 : index
    %33 = vector.load %arg3[%c1, %c0_9, %c0_10] : memref<4x64x64xbf16, #tpu.memory_space<vmem>>, vector<1x64x64xbf16>
    %34 = vector.shape_cast %33 : vector<1x64x64xbf16> to vector<64x64xbf16>
    %35 = arith.truncf %29 : vector<64x512xf32> to vector<64x512xbf16>
    %cst_11 = arith.constant dense<0.000000e+00> : vector<64x512xf32>
    %36 = tpu.matmul %34, %35, %cst_11 {dimension_numbers = #tpu.dot_dimension_numbers<[1], [0], [0], [1], [0, 0, 1, 1], [], []>} : vector<64x64xbf16>, vector<64x512xbf16>, vector<64x512xf32> -> vector<64x512xf32>
    %37 = vector.broadcast %30 : vector<64x1xf32> to vector<64x512xf32>
    %38 = arith.addf %36, %37 : vector<64x512xf32>
    %cst_12 = arith.constant 0.000000e+00 : f32
    %39 = vector.broadcast %cst_12 : f32 to vector<64x512xf32>
    %40 = arith.maximumf %38, %39 : vector<64x512xf32>
    %41 = vector.broadcast %31 : vector<64x1xf32> to vector<64x512xf32>
    %42 = arith.mulf %41, %3 : vector<64x512xf32>
    %43 = vector.broadcast %32 : vector<64x1xf32> to vector<64x512xf32>
    %44 = arith.addf %42, %43 : vector<64x512xf32>
    %45 = arith.addf %40, %44 : vector<64x512xf32>
    %cst_13 = arith.constant 0.000000e+00 : f32
    %46 = vector.broadcast %cst_13 : f32 to vector<64x512xf32>
    %47 = arith.maximumf %45, %46 : vector<64x512xf32>
    %48 = vector.extract_strided_slice %1 {offsets = [0, 8], sizes = [64, 1], strides = [1, 1]} : vector<64x24xf32> to vector<64x1xf32>
    %49 = vector.extract_strided_slice %1 {offsets = [0, 9], sizes = [64, 1], strides = [1, 1]} : vector<64x24xf32> to vector<64x1xf32>
    %50 = vector.extract_strided_slice %1 {offsets = [0, 10], sizes = [64, 1], strides = [1, 1]} : vector<64x24xf32> to vector<64x1xf32>
    %c2 = arith.constant 2 : index
    %c0_14 = arith.constant 0 : index
    %c0_15 = arith.constant 0 : index
    %51 = vector.load %arg3[%c2, %c0_14, %c0_15] : memref<4x64x64xbf16, #tpu.memory_space<vmem>>, vector<1x64x64xbf16>
    %52 = vector.shape_cast %51 : vector<1x64x64xbf16> to vector<64x64xbf16>
    %53 = arith.truncf %47 : vector<64x512xf32> to vector<64x512xbf16>
    %cst_16 = arith.constant dense<0.000000e+00> : vector<64x512xf32>
    %54 = tpu.matmul %52, %53, %cst_16 {dimension_numbers = #tpu.dot_dimension_numbers<[1], [0], [0], [1], [0, 0, 1, 1], [], []>} : vector<64x64xbf16>, vector<64x512xbf16>, vector<64x512xf32> -> vector<64x512xf32>
    %55 = vector.broadcast %48 : vector<64x1xf32> to vector<64x512xf32>
    %56 = arith.addf %54, %55 : vector<64x512xf32>
    %cst_17 = arith.constant 0.000000e+00 : f32
    %57 = vector.broadcast %cst_17 : f32 to vector<64x512xf32>
    %58 = arith.maximumf %56, %57 : vector<64x512xf32>
    %59 = vector.broadcast %49 : vector<64x1xf32> to vector<64x512xf32>
    %60 = arith.mulf %59, %3 : vector<64x512xf32>
    %61 = vector.broadcast %50 : vector<64x1xf32> to vector<64x512xf32>
    %62 = arith.addf %60, %61 : vector<64x512xf32>
    %63 = arith.addf %58, %62 : vector<64x512xf32>
    %cst_18 = arith.constant 0.000000e+00 : f32
    %64 = vector.broadcast %cst_18 : f32 to vector<64x512xf32>
    %65 = arith.maximumf %63, %64 : vector<64x512xf32>
    %66 = vector.extract_strided_slice %1 {offsets = [0, 11], sizes = [64, 1], strides = [1, 1]} : vector<64x24xf32> to vector<64x1xf32>
    %67 = vector.extract_strided_slice %1 {offsets = [0, 12], sizes = [64, 1], strides = [1, 1]} : vector<64x24xf32> to vector<64x1xf32>
    %68 = vector.extract_strided_slice %1 {offsets = [0, 13], sizes = [64, 1], strides = [1, 1]} : vector<64x24xf32> to vector<64x1xf32>
    %c3 = arith.constant 3 : index
    %c0_19 = arith.constant 0 : index
    %c0_20 = arith.constant 0 : index
    %69 = vector.load %arg3[%c3, %c0_19, %c0_20] : memref<4x64x64xbf16, #tpu.memory_space<vmem>>, vector<1x64x64xbf16>
    %70 = vector.shape_cast %69 : vector<1x64x64xbf16> to vector<64x64xbf16>
    %71 = arith.truncf %65 : vector<64x512xf32> to vector<64x512xbf16>
    %cst_21 = arith.constant dense<0.000000e+00> : vector<64x512xf32>
    %72 = tpu.matmul %70, %71, %cst_21 {dimension_numbers = #tpu.dot_dimension_numbers<[1], [0], [0], [1], [0, 0, 1, 1], [], []>} : vector<64x64xbf16>, vector<64x512xbf16>, vector<64x512xf32> -> vector<64x512xf32>
    %73 = vector.broadcast %66 : vector<64x1xf32> to vector<64x512xf32>
    %74 = arith.addf %72, %73 : vector<64x512xf32>
    %cst_22 = arith.constant 0.000000e+00 : f32
    %75 = vector.broadcast %cst_22 : f32 to vector<64x512xf32>
    %76 = arith.maximumf %74, %75 : vector<64x512xf32>
    %77 = vector.broadcast %67 : vector<64x1xf32> to vector<64x512xf32>
    %78 = arith.mulf %77, %3 : vector<64x512xf32>
    %79 = vector.broadcast %68 : vector<64x1xf32> to vector<64x512xf32>
    %80 = arith.addf %78, %79 : vector<64x512xf32>
    %81 = arith.addf %76, %80 : vector<64x512xf32>
    %cst_23 = arith.constant 0.000000e+00 : f32
    %82 = vector.broadcast %cst_23 : f32 to vector<64x512xf32>
    %83 = arith.maximumf %81, %82 : vector<64x512xf32>
    %84 = vector.extract_strided_slice %1 {offsets = [0, 14], sizes = [64, 1], strides = [1, 1]} : vector<64x24xf32> to vector<64x1xf32>
    %85 = vector.broadcast %84 : vector<64x1xf32> to vector<64x512xf32>
    %86 = arith.mulf %83, %85 : vector<64x512xf32>
    %cst_24 = arith.constant dense<0.000000e+00> : vector<512xf32>
    %87 = vector.multi_reduction <add>, %86, %cst_24 [0] : vector<64x512xf32> to vector<512xf32>
    %88 = vector.shape_cast %87 : vector<512xf32> to vector<1x512xf32>
    %89 = vector.extract_strided_slice %1 {offsets = [0, 15], sizes = [1, 1], strides = [1, 1]} : vector<64x24xf32> to vector<1x1xf32>
    %90 = vector.broadcast %89 : vector<1x1xf32> to vector<1x512xf32>
    %91 = arith.addf %88, %90 : vector<1x512xf32>
    %cst_25 = arith.constant 0.000000e+00 : f32
    %92 = vector.broadcast %cst_25 : f32 to vector<1x512xf32>
    %93 = arith.minimumf %91, %92 : vector<1x512xf32>
    %94 = vector.extract_strided_slice %1 {offsets = [0, 16], sizes = [1, 1], strides = [1, 1]} : vector<64x24xf32> to vector<1x1xf32>
    %95 = vector.broadcast %94 : vector<1x1xf32> to vector<1x512xf32>
    %96 = arith.mulf %95, %0 : vector<1x512xf32>
    %97 = vector.extract_strided_slice %1 {offsets = [0, 17], sizes = [1, 1], strides = [1, 1]} : vector<64x24xf32> to vector<1x1xf32>
    %98 = vector.broadcast %97 : vector<1x1xf32> to vector<1x512xf32>
    %99 = arith.addf %96, %98 : vector<1x512xf32>
    %100 = arith.addf %93, %99 : vector<1x512xf32>
    %c0_26 = arith.constant 0 : index
    %c0_27 = arith.constant 0 : index
    %101 = vector.load %arg4[%c0_26, %c0_27] : memref<1x512xf32, #tpu.memory_space<vmem>>, vector<1x512xf32>
    tpu.vector_store %arg4[%c0_26, %c0_27], %100 {strides = array<i32>} : memref<1x512xf32, #tpu.memory_space<vmem>>, vector<1x512xf32>,
    return
  }
  func.func @transform_0(%arg0: i32) -> (i32, i32) {
    %c0_i32 = arith.constant 0 : i32
    %c0_i32_0 = arith.constant 0 : i32
    return %c0_i32, %arg0 : i32, i32
  }
  func.func @transform_1(%arg0: i32) -> (i32, i32) {
    %c0_i32 = arith.constant 0 : i32
    %c0_i32_0 = arith.constant 0 : i32
    %c0_i32_1 = arith.constant 0 : i32
    return %c0_i32, %c0_i32_0 : i32, i32
  }
  func.func @transform_2(%arg0: i32) -> (i32, i32, i32) {
    %c0_i32 = arith.constant 0 : i32
    %c0_i32_0 = arith.constant 0 : i32
    %c0_i32_1 = arith.constant 0 : i32
    %c0_i32_2 = arith.constant 0 : i32
    return %c0_i32, %c0_i32_0, %c0_i32_1 : i32, i32, i32
  }
  func.func @transform_3(%arg0: i32) -> (i32, i32) {
    %c0_i32 = arith.constant 0 : i32
    %c0_i32_0 = arith.constant 0 : i32
    return %c0_i32, %arg0 : i32, i32
  }
}

</mosaic_0001>

<llo_original>
// kernel: mul.3
$region0: #{mul.3}
  #allocation0 [shape = 's32[1]{0}', space=sflag, size = 0x4, scoped, tag = 'scoped memory for mul.3']
  %s0 = inlined_call_operand.<no memory space> [shape: f32[], index: 0, kind: input, shape index: {}]
  %s1 = inlined_call_operand.vmem [shape: f32[64,1], index: 1, kind: output, shape index: {}]
  %v2 = vstv %s0
  %3 = vst [vmem:[%s1] sm:$0x1] %v2

// kernel: icnn_forward.1
$region0: #{icnn_forward.1}
  #allocation0 [shape = 'u32[]', space=smem, size = 0x4, offset = 0x4, fixed_abs, tag = 'smem constant byte address 0x4 - core index']
  #allocation1 [shape = 'u32[144,128]{1,0:T(1,128)}', space=vmem, size = 0x12000, scoped, tag = 'internal scratch']
  %s0 = inlined_call_operand.vmem [shape: f32[1,1024], index: 0, kind: input, shape index: {}]
  %s1 = inlined_call_operand.vmem [shape: f32[64,24], index: 1, kind: input, shape index: {}]
  %s2 = inlined_call_operand.vmem [shape: bf16[4,64,64], index: 2, kind: input, shape index: {}]
  %s3 = inlined_call_operand.vmem [shape: f32[1,1024], index: 3, kind: output, shape index: {}]
  %s4 = sld [smem:[#allocation0]]
  $region45: #{icnn_forward.1} parent=0
    _
  %s6 = ssub.s32 1, %s4
  %s7 = scalar_select 0, %s6, %s4
  loop: start=0, step=1, limit=4
  $region2: #{icnn_forward.1} parent=0 // loop_pre_header
    _
  $region3: #{icnn_forward.1} parent=0 // loop_header
    %s9 = sphi 0, %s13
    %p10 = scmp.ge.s32.totalorder %s9, 4
    %s19 = sphi 0, %s21
    %s22 = sphi 0, %s19
    %s23 = sphi 0, %s22
    %s39 = sphi 0, %s23
    %s43 = sphi 0, %s43
    %s45 = sphi 0, %s43
    %s46 = sphi 0, %s45
    %s60 = sphi 0, %s46
    %s64 = sphi 0, %s64
    %s66 = sphi 0, %s64
    %s67 = sphi 0, %s66
    %s81 = sphi 0, %s67
    %s87 = sphi 0, %s89
    %s90 = sphi 0, %s87
    %s91 = sphi 0, %s90
    %s107 = sphi 0, %s91
  $region4: #{icnn_forward.1} parent=0 // loop_header_branch
    %12 = sbr.rel (%p10) target = $region8
  $region5: #{icnn_forward.1} parent=0 // loop_body
    %s14 = ssub.s32 %s9, 1
    %s15 = ssub.s32 %s9, 2
    %s16 = sadd.s32 %s9, 1
    %s17 = ssub.s32 %s9, %s16
    %p18 = scmp.eq.s32.totalorder %s17, 0
    %s20 = sadd.s32 %s19, 1
    %s21 = scalar_select %p18, %s19, %s20
    %p24 = pneg %p18
    %p25 = scmp.eq.s32.totalorder %s9, 1
    %p26 = por %p24, %p25
    %p27 = scmp.ne.s32.totalorder %s19, %s22
    %p28 = scmp.eq.s32.totalorder %s9, 0
    %p29 = por %p27, %p28
    %p30 = scmp.ne.s32.totalorder %s19, %s22
    %p31 = scmp.eq.s32.totalorder %s14, 1
    %p32 = por %p30, %p31
    %p33 = scmp.ne.s32.totalorder %s22, %s23
    %p34 = scmp.eq.s32.totalorder %s14, 0
    %p35 = por %p33, %p34
    %p36 = scmp.ne.s32.totalorder %s22, %s23
    %p37 = scmp.eq.s32.totalorder %s15, 1
    %p38 = por %p36, %p37
    %p40 = scmp.ne.s32.totalorder %s23, %s39
    %p41 = scmp.eq.s32.totalorder %s15, 0
    %p42 = por %p40, %p41
    %s44 = sadd.s32 %s43, 1
    %p47 = scmp.eq.s32.totalorder %s9, 1
    %p48 = scmp.ne.s32.totalorder %s43, %s45
    %p49 = scmp.eq.s32.totalorder %s9, 0
    %p50 = por %p48, %p49
    %p51 = scmp.ne.s32.totalorder %s43, %s45
    %p52 = scmp.eq.s32.totalorder %s14, 1
    %p53 = por %p51, %p52
    %p54 = scmp.ne.s32.totalorder %s45, %s46
    %p55 = scmp.eq.s32.totalorder %s14, 0
    %p56 = por %p54, %p55
    %p57 = scmp.ne.s32.totalorder %s45, %s46
    %p58 = scmp.eq.s32.totalorder %s15, 1
    %p59 = por %p57, %p58
    %p61 = scmp.ne.s32.totalorder %s46, %s60
    %p62 = scmp.eq.s32.totalorder %s15, 0
    %p63 = por %p61, %p62
    %s65 = sadd.s32 %s64, 1
    %p68 = scmp.eq.s32.totalorder %s9, 1
    %p69 = scmp.ne.s32.totalorder %s64, %s66
    %p70 = scmp.eq.s32.totalorder %s9, 0
    %p71 = por %p69, %p70
    %p72 = scmp.ne.s32.totalorder %s64, %s66
    %p73 = scmp.eq.s32.totalorder %s14, 1
    %p74 = por %p72, %p73
    %p75 = scmp.ne.s32.totalorder %s66, %s67
    %p76 = scmp.eq.s32.totalorder %s14, 0
    %p77 = por %p75, %p76
    %p78 = scmp.ne.s32.totalorder %s66, %s67
    %p79 = scmp.eq.s32.totalorder %s15, 1
    %p80 = por %p78, %p79
    %p82 = scmp.ne.s32.totalorder %s67, %s81
    %p83 = scmp.eq.s32.totalorder %s15, 0
    %p84 = por %p82, %p83
    %s85 = ssub.s32 %s9, %s16
    %p86 = scmp.eq.s32.totalorder %s85, 0
    %s88 = sadd.s32 %s87, 1
    %s89 = scalar_select %p86, %s87, %s88
    %p92 = pneg %p86
    %p93 = scmp.eq.s32.totalorder %s9, 1
    %p94 = por %p92, %p93
    %p95 = scmp.ne.s32.totalorder %s87, %s90
    %p96 = scmp.eq.s32.totalorder %s9, 0
    %p97 = por %p95, %p96
    %p98 = scmp.ne.s32.totalorder %s87, %s90
    %p99 = scmp.eq.s32.totalorder %s14, 1
    %p100 = por %p98, %p99
    %p101 = scmp.ne.s32.totalorder %s90, %s91
    %p102 = scmp.eq.s32.totalorder %s14, 0
    %p103 = por %p101, %p102
    %p104 = scmp.ne.s32.totalorder %s90, %s91
    %p105 = scmp.eq.s32.totalorder %s15, 1
    %p106 = por %p104, %p105
    %p108 = scmp.ne.s32.totalorder %s91, %s107
    %p109 = scmp.eq.s32.totalorder %s15, 0
    %p110 = por %p108, %p109
    %p111 = scmp.le.s32.totalorder 1, %s9
    %p112 = scmp.lt.s32.totalorder %s9, 3
    %p113 = pnand %p111, %p112
    %p114 = pneg %p113
    // Predicated region
    $region9: #{icnn_forward.1} parent=5 // pred_check
      _
    $region10: #{icnn_forward.1} parent=5 // pred_check_branch
      %116 = sbr.rel (%p113) target = $region12
    $region11: #{icnn_forward.1} parent=5 // pred_region
      %s117 = ssub.s32 %s9, 1
      // Predicated region
      $region13: #{icnn_forward.1} parent=11 // pred_check
        %p118 = pneg %p56
      $region14: #{icnn_forward.1} parent=11 // pred_check_branch
        %120 = sbr.rel (%p118) target = $region16
      $region15: #{icnn_forward.1} parent=11 // pred_region
        _
      $region16: #{icnn_forward.1} parent=11 // pred_fallthru
        _
      // Predicated region
      $region17: #{icnn_forward.1} parent=11 // pred_check
        %p121 = pneg %p77
      $region18: #{icnn_forward.1} parent=11 // pred_check_branch
        %123 = sbr.rel (%p121) target = $region20
      $region19: #{icnn_forward.1} parent=11 // pred_region
        _
      $region20: #{icnn_forward.1} parent=11 // pred_fallthru
        _
    $region12: #{icnn_forward.1} parent=5 // pred_fallthru
      _
    %p124 = scmp.lt.s32.totalorder %s9, 2
    // Predicated region
    $region21: #{icnn_forward.1} parent=5 // pred_check
      %p125 = pneg %p124
    $region22: #{icnn_forward.1} parent=5 // pred_check_branch
      %127 = sbr.rel (%p125) target = $region24
    $region23: #{icnn_forward.1} parent=5 // pred_region
      // Predicated region
      $region25: #{icnn_forward.1} parent=23 // pred_check
        %p128 = pneg %p29
      $region26: #{icnn_forward.1} parent=23 // pred_check_branch
        %130 = sbr.rel (%p128) target = $region28
      $region27: #{icnn_forward.1} parent=23 // pred_region
        %s131 = smul.u32 4, %s9
        %p132 = scmp.lt.s32.totalorder %s131, 7
        %s133 = scalar_select %p132, %s131, 7
        %s134 = scalar_lea.vmem %s0, %s133
        %s135 = smul.u32 4, %s9
      $region28: #{icnn_forward.1} parent=23 // pred_fallthru
        _
    $region24: #{icnn_forward.1} parent=5 // pred_fallthru
      _
    %p136 = scmp.le.s32.totalorder 1, %s9
    %p137 = scmp.lt.s32.totalorder %s9, 3
    %p138 = pnand %p136, %p137
    %p139 = pneg %p138
    // Predicated region
    $region29: #{icnn_forward.1} parent=5 // pred_check
      _
    $region30: #{icnn_forward.1} parent=5 // pred_check_branch
      %141 = sbr.rel (%p138) target = $region32
    $region31: #{icnn_forward.1} parent=5 // pred_region
      %s142 = ssub.s32 %s9, 1
      %s143 = smul.u32 4, %s14
      %p144 = scmp.lt.s32.totalorder %s143, 7
      %s145 = scalar_select %p144, %s143, 7
      %s146 = scalar_lea.vmem %s0, %s145
      %p147 = pneg %p35
      %p148 = pneg %p32
      %p149 = pneg %p56
      %p150 = pneg %p53
      %p151 = pneg %p77
      %p152 = pneg %p74
      %p153 = pneg %p103
      %p154 = pneg %p100
      %s155 = smul.u32 4, %s14
      %p156 = scmp.lt.s32.totalorder %s155, 7
      %s157 = scalar_select %p156, %s155, 7
      %s158 = scalar_lea.vmem %s3, %s157
      %s159 = smul.u32 4, %s14
      %p160 = scmp.lt.s32.totalorder %s159, 7
      %s161 = scalar_select %p160, %s159, 7
      %s162 = scalar_lea.vmem %s0, %s161
      %s163 = smul.u32 4, %s14
      %s164 = smul.u32 4, %s14
      %p165 = scmp.lt.s32.totalorder %s164, 7
      %s166 = scalar_select %p165, %s164, 7
      %s167 = scalar_lea.vmem %s3, %s166
      %s168 = smul.u32 4, %s14
      %v170 = vld [vmem:[%s162] sm:$0xf]
      %v171 = vld [vmem:[%s1] sm:$0xff]
      %v172 = vld [vmem:[%s1 + $0x8] sm:$0xff]
      %v173 = vld [vmem:[%s1 + $0x10] sm:$0xff]
      %v174 = vld [vmem:[%s1 + $0x18] sm:$0xff]
      %v175 = vld [vmem:[%s1 + $0x20] sm:$0xff]
      %v176 = vld [vmem:[%s1 + $0x28] sm:$0xff]
      %v177 = vld [vmem:[%s1 + $0x30] sm:$0xff]
      %v178 = vld [vmem:[%s1 + $0x38] sm:$0xff]
      %v180 = vlaneseq
      %v181 = vshrl.u32 %v180, 7
      %v182 = vsub.s32 0, %v181
      %v183 = vrot.slane %v170, %v182
      %v184 = vlaneseq
      %v185 = vshrl.u32 %v184, 7
      %v186 = vsub.s32 1, %v185
      %v187 = vrot.slane %v170, %v186
      %v188 = vlaneseq
      %v189 = vshrl.u32 %v188, 7
      %v190 = vsub.s32 2, %v189
      %v191 = vrot.slane %v170, %v190
      %v192 = vlaneseq
      %v193 = vshrl.u32 %v192, 7
      %v194 = vsub.s32 3, %v193
      %v195 = vrot.slane %v170, %v194
      %201 = vset.pattern.permute.xlu0 0
      %202 = vperm.xlu0 %201, %v171
      %v203 = vpop.permute.xlu0 %202
      %206 = vset.pattern.permute.xlu0 0
      %207 = vperm.xlu0 %206, %v172
      %v208 = vpop.permute.xlu0 %207
      %211 = vset.pattern.permute.xlu0 0
      %212 = vperm.xlu0 %211, %v173
      %v213 = vpop.permute.xlu0 %212
      %216 = vset.pattern.permute.xlu0 0
      %217 = vperm.xlu0 %216, %v174
      %v218 = vpop.permute.xlu0 %217
      %221 = vset.pattern.permute.xlu0 0
      %222 = vperm.xlu0 %221, %v175
      %v223 = vpop.permute.xlu0 %222
      %226 = vset.pattern.permute.xlu0 0
      %227 = vperm.xlu0 %226, %v176
      %v228 = vpop.permute.xlu0 %227
      %231 = vset.pattern.permute.xlu0 0
      %232 = vperm.xlu0 %231, %v177
      %v233 = vpop.permute.xlu0 %232
      %236 = vset.pattern.permute.xlu0 0
      %237 = vperm.xlu0 %236, %v178
      %v238 = vpop.permute.xlu0 %237
      %v240 = vmul.f32 %v203, %v183
      %v241 = vmul.f32 %v203, %v187
      %v242 = vmul.f32 %v203, %v191
      %v243 = vmul.f32 %v203, %v195
      %v244 = vmul.f32 %v208, %v183
      %v245 = vmul.f32 %v208, %v187
      %v246 = vmul.f32 %v208, %v191
      %v247 = vmul.f32 %v208, %v195
      %v248 = vmul.f32 %v213, %v183
      %v249 = vmul.f32 %v213, %v187
      %v250 = vmul.f32 %v213, %v191
      %v251 = vmul.f32 %v213, %v195
      %v252 = vmul.f32 %v218, %v183
      %v253 = vmul.f32 %v218, %v187
      %v254 = vmul.f32 %v218, %v191
      %v255 = vmul.f32 %v218, %v195
      %v256 = vmul.f32 %v223, %v183
      %v257 = vmul.f32 %v223, %v187
      %v258 = vmul.f32 %v223, %v191
      %v259 = vmul.f32 %v223, %v195
      %v260 = vmul.f32 %v228, %v183
      %v261 = vmul.f32 %v228, %v187
      %v262 = vmul.f32 %v228, %v191
      %v263 = vmul.f32 %v228, %v195
      %v264 = vmul.f32 %v233, %v183
      %v265 = vmul.f32 %v233, %v187
      %v266 = vmul.f32 %v233, %v191
      %v267 = vmul.f32 %v233, %v195
      %v268 = vmul.f32 %v238, %v183
      %v269 = vmul.f32 %v238, %v187
      %v270 = vmul.f32 %v238, %v191
      %v271 = vmul.f32 %v238, %v195
      %272 = vset.pattern.permute.xlu0 1
      %273 = vperm.xlu0 %272, %v171
      %v274 = vpop.permute.xlu0 %273
      %276 = vset.pattern.permute.xlu0 1
      %277 = vperm.xlu0 %276, %v172
      %v278 = vpop.permute.xlu0 %277
      %280 = vset.pattern.permute.xlu0 1
      %281 = vperm.xlu0 %280, %v173
      %v282 = vpop.permute.xlu0 %281
      %284 = vset.pattern.permute.xlu0 1
      %285 = vperm.xlu0 %284, %v174
      %v286 = vpop.permute.xlu0 %285
      %288 = vset.pattern.permute.xlu0 1
      %289 = vperm.xlu0 %288, %v175
      %v290 = vpop.permute.xlu0 %289
      %292 = vset.pattern.permute.xlu0 1
      %293 = vperm.xlu0 %292, %v176
      %v294 = vpop.permute.xlu0 %293
      %296 = vset.pattern.permute.xlu0 1
      %297 = vperm.xlu0 %296, %v177
      %v298 = vpop.permute.xlu0 %297
      %300 = vset.pattern.permute.xlu0 1
      %301 = vperm.xlu0 %300, %v178
      %v302 = vpop.permute.xlu0 %301
      %v304 = vadd.f32 %v240, %v274
      %v305 = vadd.f32 %v241, %v274
      %v306 = vadd.f32 %v242, %v274
      %v307 = vadd.f32 %v243, %v274
      %v308 = vadd.f32 %v244, %v278
      %v309 = vadd.f32 %v245, %v278
      %v310 = vadd.f32 %v246, %v278
      %v311 = vadd.f32 %v247, %v278
      %v312 = vadd.f32 %v248, %v282
      %v313 = vadd.f32 %v249, %v282
      %v314 = vadd.f32 %v250, %v282
      %v315 = vadd.f32 %v251, %v282
      %v316 = vadd.f32 %v252, %v286
      %v317 = vadd.f32 %v253, %v286
      %v318 = vadd.f32 %v254, %v286
      %v319 = vadd.f32 %v255, %v286
      %v320 = vadd.f32 %v256, %v290
      %v321 = vadd.f32 %v257, %v290
      %v322 = vadd.f32 %v258, %v290
      %v323 = vadd.f32 %v259, %v290
      %v324 = vadd.f32 %v260, %v294
      %v325 = vadd.f32 %v261, %v294
      %v326 = vadd.f32 %v262, %v294
      %v327 = vadd.f32 %v263, %v294
      %v328 = vadd.f32 %v264, %v298
      %v329 = vadd.f32 %v265, %v298
      %v330 = vadd.f32 %v266, %v298
      %v331 = vadd.f32 %v267, %v298
      %v332 = vadd.f32 %v268, %v302
      %v333 = vadd.f32 %v269, %v302
      %v334 = vadd.f32 %v270, %v302
      %v335 = vadd.f32 %v271, %v302
      %v336 = vmax.f32 %v304, 0.0
      %v337 = vmax.f32 %v305, 0.0
      %v338 = vmax.f32 %v306, 0.0
      %v339 = vmax.f32 %v307, 0.0
      %v340 = vmax.f32 %v308, 0.0
      %v341 = vmax.f32 %v309, 0.0
      %v342 = vmax.f32 %v310, 0.0
      %v343 = vmax.f32 %v311, 0.0
      %v344 = vmax.f32 %v312, 0.0
      %v345 = vmax.f32 %v313, 0.0
      %v346 = vmax.f32 %v314, 0.0
      %v347 = vmax.f32 %v315, 0.0
      %v348 = vmax.f32 %v316, 0.0
      %v349 = vmax.f32 %v317, 0.0
      %v350 = vmax.f32 %v318, 0.0
      %v351 = vmax.f32 %v319, 0.0
      %v352 = vmax.f32 %v320, 0.0
      %v353 = vmax.f32 %v321, 0.0
      %v354 = vmax.f32 %v322, 0.0
      %v355 = vmax.f32 %v323, 0.0
      %v356 = vmax.f32 %v324, 0.0
      %v357 = vmax.f32 %v325, 0.0
      %v358 = vmax.f32 %v326, 0.0
      %v359 = vmax.f32 %v327, 0.0
      %v360 = vmax.f32 %v328, 0.0
      %v361 = vmax.f32 %v329, 0.0
      %v362 = vmax.f32 %v330, 0.0
      %v363 = vmax.f32 %v331, 0.0
      %v364 = vmax.f32 %v332, 0.0
      %v365 = vmax.f32 %v333, 0.0
      %v366 = vmax.f32 %v334, 0.0
      %v367 = vmax.f32 %v335, 0.0
      %v368 = vld [vmem:[%s2] sm:$0xf]
      %v369 = vld [vmem:[%s2 + $0x4] sm:$0xf]
      %v370 = vld [vmem:[%s2 + $0x8] sm:$0xf]
      %v371 = vld [vmem:[%s2 + $0xc] sm:$0xf]
      %v372 = vld [vmem:[%s2 + $0x10] sm:$0xf]
      %v373 = vld [vmem:[%s2 + $0x14] sm:$0xf]
      %v374 = vld [vmem:[%s2 + $0x18] sm:$0xf]
      %v375 = vld [vmem:[%s2 + $0x1c] sm:$0xf]
      %v376 = vpack.c.bf16 %v340, %v336
      %v377 = vpack.c.bf16 %v341, %v337
      %v378 = vpack.c.bf16 %v342, %v338
      %v379 = vpack.c.bf16 %v343, %v339
      %v380 = vpack.c.bf16 %v348, %v344
      %v381 = vpack.c.bf16 %v349, %v345
      %v382 = vpack.c.bf16 %v350, %v346
      %v383 = vpack.c.bf16 %v351, %v347
      %v384 = vpack.c.bf16 %v356, %v352
      %v385 = vpack.c.bf16 %v357, %v353
      %v386 = vpack.c.bf16 %v358, %v354
      %v387 = vpack.c.bf16 %v359, %v355
      %v388 = vpack.c.bf16 %v364, %v360
      %v389 = vpack.c.bf16 %v365, %v361
      %v390 = vpack.c.bf16 %v366, %v362
      %v391 = vpack.c.bf16 %v367, %v363
      %392 = vset.pattern.permute.xlu0 2
      %393 = vperm.xlu0 %392, %v171
      %v394 = vpop.permute.xlu0 %393
      %396 = vset.pattern.permute.xlu0 2
      %397 = vperm.xlu0 %396, %v172
      %v398 = vpop.permute.xlu0 %397
      %400 = vset.pattern.permute.xlu0 2
      %401 = vperm.xlu0 %400, %v173
      %v402 = vpop.permute.xlu0 %401
      %404 = vset.pattern.permute.xlu0 2
      %405 = vperm.xlu0 %404, %v174
      %v406 = vpop.permute.xlu0 %405
      %408 = vset.pattern.permute.xlu0 2
      %409 = vperm.xlu0 %408, %v175
      %v410 = vpop.permute.xlu0 %409
      %412 = vset.pattern.permute.xlu0 2
      %413 = vperm.xlu0 %412, %v176
      %v414 = vpop.permute.xlu0 %413
      %416 = vset.pattern.permute.xlu0 2
      %417 = vperm.xlu0 %416, %v177
      %v418 = vpop.permute.xlu0 %417
      %420 = vset.pattern.permute.xlu0 2
      %421 = vperm.xlu0 %420, %v178
      %v422 = vpop.permute.xlu0 %421
      %v432 = vunpack.c.l.b16 %v368
      %v433 = vunpack.c.l.b16 %v369
      %v434 = vunpack.c.l.b16 %v370
      %v435 = vunpack.c.l.b16 %v371
      %v436 = vunpack.c.l.b16 %v372
      %v437 = vunpack.c.l.b16 %v373
      %v438 = vunpack.c.l.b16 %v374
      %v439 = vunpack.c.l.b16 %v375
      %v440 = vpack.c.b16 %v433, %v432
      %v441 = vpack.c.b16 %v435, %v434
      %v442 = vpack.c.b16 %v437, %v436
      %v443 = vpack.c.b16 %v439, %v438
      %vm444 = vcmask 523264
      %v446 = vsel %vm444, %v440, 0
      %v449 = vsel %vm444, %v441, 0
      %v452 = vsel %vm444, %v442, 0
      %v455 = vsel %vm444, %v443, 0
      %457 = vmatprep.subr.bf16.mxu0 0
      %458 = vmatpush1.bf16.msra.mxu0 0
      %459 = vmatprep.subr.bf16.mxu0 0
      %460 = vmatpush1.bf16.msra.mxu0 0
      %461 = vmatprep.subr.bf16.mxu0 0
      %462 = vmatpush1.bf16.msra.mxu0 0
      %463 = vmatprep.subr.bf16.mxu0 0
      %464 = vmatpush1.bf16.msra.mxu0 0
      %465 = vmatprep.subr.bf16.mxu0 %v389
      %466 = vmatpush1.bf16.msra.mxu0 %v388
      %467 = vmatprep.subr.bf16.mxu0 %v385
      %468 = vmatpush1.bf16.msra.mxu0 %v384
      %469 = vmatprep.subr.bf16.mxu0 %v381
      %470 = vmatpush1.bf16.msra.mxu0 %v380
      %471 = vmatprep.subr.bf16.mxu0 %v377
      %472 = vmatpush1.bf16.msra.mxu0 %v376
      %473 = vmatprep.subr.bf16.mxu0 0
      %474 = vmatpush2.bf16.msra.mxu0 0
      %475 = vmatprep.subr.bf16.mxu0 0
      %476 = vmatpush2.bf16.msra.mxu0 0
      %477 = vmatprep.subr.bf16.mxu0 0
      %478 = vmatpush2.bf16.msra.mxu0 0
      %479 = vmatprep.subr.bf16.mxu0 0
      %480 = vmatpush2.bf16.msra.mxu0 0
      %481 = vmatprep.subr.bf16.mxu0 0
      %482 = vmatpush2.bf16.msra.mxu0 0
      %483 = vmatprep.subr.bf16.mxu0 0
      %484 = vmatpush2.bf16.msra.mxu0 0
      %485 = vmatprep.subr.bf16.mxu0 0
      %486 = vmatpush2.bf16.msra.mxu0 0
      %487 = vmatprep.subr.bf16.mxu0 0
      %488 = vmatpush2.bf16.msra.mxu0 0
      %489 = vmatprep.mubr.bf16.mxu0 0
      %490 = vmatmul.mubr.bf16.gmra.mxu0 %v446
      %v491 = vpop.f32.mrf.mxu0
      %v492 = vadd.f32 %v394, %v491
      %v493 = vpop.f32.mrf.mxu0
      %v494 = vadd.f32 %v394, %v493
      %v495 = vpop.f32.mrf.mxu0
      %v496 = vadd.f32 %v398, %v495
      %v497 = vpop.f32.mrf.mxu0
      %v498 = vadd.f32 %v398, %v497
      %499 = vmatprep.mubr.bf16.mxu0 0
      %500 = vmatmul.mubr.bf16.gmra.mxu0 %v449
      %v501 = vpop.f32.mrf.mxu0
      %v502 = vadd.f32 %v402, %v501
      %v503 = vpop.f32.mrf.mxu0
      %v504 = vadd.f32 %v402, %v503
      %v505 = vpop.f32.mrf.mxu0
      %v506 = vadd.f32 %v406, %v505
      %v507 = vpop.f32.mrf.mxu0
      %v508 = vadd.f32 %v406, %v507
      %509 = vmatprep.mubr.bf16.mxu0 0
      %510 = vmatmul.mubr.bf16.gmra.mxu0 %v452
      %v511 = vpop.f32.mrf.mxu0
      %v512 = vadd.f32 %v410, %v511
      %v513 = vpop.f32.mrf.mxu0
      %v514 = vadd.f32 %v410, %v513
      %v515 = vpop.f32.mrf.mxu0
      %v516 = vadd.f32 %v414, %v515
      %v517 = vpop.f32.mrf.mxu0
      %v518 = vadd.f32 %v414, %v517
      %519 = vmatprep.mubr.bf16.mxu0 0
      %520 = vmatmul.mubr.bf16.gmra.mxu0 %v455
      %v521 = vpop.f32.mrf.mxu0
      %v522 = vadd.f32 %v418, %v521
      %v523 = vpop.f32.mrf.mxu0
      %v524 = vadd.f32 %v418, %v523
      %v525 = vpop.f32.mrf.mxu0
      %v526 = vadd.f32 %v422, %v525
      %v527 = vpop.f32.mrf.mxu0
      %v528 = vadd.f32 %v422, %v527
      %529 = vdwg.mxu0
      %530 = vmatprep.subr.bf16.mxu0 0
      %531 = vmatpush1.bf16.msra.mxu0 0
      %532 = vmatprep.subr.bf16.mxu0 0
      %533 = vmatpush1.bf16.msra.mxu0 0
      %534 = vmatprep.subr.bf16.mxu0 0
      %535 = vmatpush1.bf16.msra.mxu0 0
      %536 = vmatprep.subr.bf16.mxu0 0
      %537 = vmatpush1.bf16.msra.mxu0 0
      %538 = vmatprep.subr.bf16.mxu0 %v391
      %539 = vmatpush1.bf16.msra.mxu0 %v390
      %540 = vmatprep.subr.bf16.mxu0 %v387
      %541 = vmatpush1.bf16.msra.mxu0 %v386
      %542 = vmatprep.subr.bf16.mxu0 %v383
      %543 = vmatpush1.bf16.msra.mxu0 %v382
      %544 = vmatprep.subr.bf16.mxu0 %v379
      %545 = vmatpush1.bf16.msra.mxu0 %v378
      %546 = vmatprep.subr.bf16.mxu0 0
      %547 = vmatpush2.bf16.msra.mxu0 0
      %548 = vmatprep.subr.bf16.mxu0 0
      %549 = vmatpush2.bf16.msra.mxu0 0
      %550 = vmatprep.subr.bf16.mxu0 0
      %551 = vmatpush2.bf16.msra.mxu0 0
      %552 = vmatprep.subr.bf16.mxu0 0
      %553 = vmatpush2.bf16.msra.mxu0 0
      %554 = vmatprep.subr.bf16.mxu0 0
      %555 = vmatpush2.bf16.msra.mxu0 0
      %556 = vmatprep.subr.bf16.mxu0 0
      %557 = vmatpush2.bf16.msra.mxu0 0
      %558 = vmatprep.subr.bf16.mxu0 0
      %559 = vmatpush2.bf16.msra.mxu0 0
      %560 = vmatprep.subr.bf16.mxu0 0
      %561 = vmatpush2.bf16.msra.mxu0 0
      %562 = vmatprep.mubr.bf16.mxu0 0
      %563 = vmatmul.mubr.bf16.gmra.mxu0 %v446
      %v564 = vpop.f32.mrf.mxu0
      %v565 = vadd.f32 %v394, %v564
      %v566 = vpop.f32.mrf.mxu0
      %v567 = vadd.f32 %v394, %v566
      %v568 = vpop.f32.mrf.mxu0
      %v569 = vadd.f32 %v398, %v568
      %v570 = vpop.f32.mrf.mxu0
      %v571 = vadd.f32 %v398, %v570
      %572 = vmatprep.mubr.bf16.mxu0 0
      %573 = vmatmul.mubr.bf16.gmra.mxu0 %v449
      %v574 = vpop.f32.mrf.mxu0
      %v575 = vadd.f32 %v402, %v574
      %v576 = vpop.f32.mrf.mxu0
      %v577 = vadd.f32 %v402, %v576
      %v578 = vpop.f32.mrf.mxu0
      %v579 = vadd.f32 %v406, %v578
      %v580 = vpop.f32.mrf.mxu0
      %v581 = vadd.f32 %v406, %v580
      %582 = vmatprep.mubr.bf16.mxu0 0
      %583 = vmatmul.mubr.bf16.gmra.mxu0 %v452
      %v584 = vpop.f32.mrf.mxu0
      %v585 = vadd.f32 %v410, %v584
      %v586 = vpop.f32.mrf.mxu0
      %v587 = vadd.f32 %v410, %v586
      %v588 = vpop.f32.mrf.mxu0
      %v589 = vadd.f32 %v414, %v588
      %v590 = vpop.f32.mrf.mxu0
      %v591 = vadd.f32 %v414, %v590
      %592 = vmatprep.mubr.bf16.mxu0 0
      %593 = vmatmul.mubr.bf16.gmra.mxu0 %v455
      %v594 = vpop.f32.mrf.mxu0
      %v595 = vadd.f32 %v418, %v594
      %v596 = vpop.f32.mrf.mxu0
      %v597 = vadd.f32 %v418, %v596
      %v598 = vpop.f32.mrf.mxu0
      %v599 = vadd.f32 %v422, %v598
      %v600 = vpop.f32.mrf.mxu0
      %v601 = vadd.f32 %v422, %v600
      %602 = vdwg.mxu0
      %v603 = vmax.f32 %v492, 0.0
      %v604 = vmax.f32 %v494, 0.0
      %v605 = vmax.f32 %v565, 0.0
      %v606 = vmax.f32 %v567, 0.0
      %v607 = vmax.f32 %v496, 0.0
      %v608 = vmax.f32 %v498, 0.0
      %v609 = vmax.f32 %v569, 0.0
      %v610 = vmax.f32 %v571, 0.0
      %v611 = vmax.f32 %v502, 0.0
      %v612 = vmax.f32 %v504, 0.0
      %v613 = vmax.f32 %v575, 0.0
      %v614 = vmax.f32 %v577, 0.0
      %v615 = vmax.f32 %v506, 0.0
      %v616 = vmax.f32 %v508, 0.0
      %v617 = vmax.f32 %v579, 0.0
      %v618 = vmax.f32 %v581, 0.0
      %v619 = vmax.f32 %v512, 0.0
      %v620 = vmax.f32 %v514, 0.0
      %v621 = vmax.f32 %v585, 0.0
      %v622 = vmax.f32 %v587, 0.0
      %v623 = vmax.f32 %v516, 0.0
      %v624 = vmax.f32 %v518, 0.0
      %v625 = vmax.f32 %v589, 0.0
      %v626 = vmax.f32 %v591, 0.0
      %v627 = vmax.f32 %v522, 0.0
      %v628 = vmax.f32 %v524, 0.0
      %v629 = vmax.f32 %v595, 0.0
      %v630 = vmax.f32 %v597, 0.0
      %v631 = vmax.f32 %v526, 0.0
      %v632 = vmax.f32 %v528, 0.0
      %v633 = vmax.f32 %v599, 0.0
      %v634 = vmax.f32 %v601, 0.0
      %635 = vset.pattern.permute.xlu0 3
      %636 = vperm.xlu0 %635, %v171
      %v637 = vpop.permute.xlu0 %636
      %639 = vset.pattern.permute.xlu0 3
      %640 = vperm.xlu0 %639, %v172
      %v641 = vpop.permute.xlu0 %640
      %643 = vset.pattern.permute.xlu0 3
      %644 = vperm.xlu0 %643, %v173
      %v645 = vpop.permute.xlu0 %644
      %647 = vset.pattern.permute.xlu0 3
      %648 = vperm.xlu0 %647, %v174
      %v649 = vpop.permute.xlu0 %648
      %651 = vset.pattern.permute.xlu0 3
      %652 = vperm.xlu0 %651, %v175
      %v653 = vpop.permute.xlu0 %652
      %655 = vset.pattern.permute.xlu0 3
      %656 = vperm.xlu0 %655, %v176
      %v657 = vpop.permute.xlu0 %656
      %659 = vset.pattern.permute.xlu0 3
      %660 = vperm.xlu0 %659, %v177
      %v661 = vpop.permute.xlu0 %660
      %663 = vset.pattern.permute.xlu0 3
      %664 = vperm.xlu0 %663, %v178
      %v665 = vpop.permute.xlu0 %664
      %v667 = vmul.f32 %v637, %v183
      %v668 = vmul.f32 %v637, %v187
      %v669 = vmul.f32 %v637, %v191
      %v670 = vmul.f32 %v637, %v195
      %v671 = vmul.f32 %v641, %v183
      %v672 = vmul.f32 %v641, %v187
      %v673 = vmul.f32 %v641, %v191
      %v674 = vmul.f32 %v641, %v195
      %v675 = vmul.f32 %v645, %v183
      %v676 = vmul.f32 %v645, %v187
      %v677 = vmul.f32 %v645, %v191
      %v678 = vmul.f32 %v645, %v195
      %v679 = vmul.f32 %v649, %v183
      %v680 = vmul.f32 %v649, %v187
      %v681 = vmul.f32 %v649, %v191
      %v682 = vmul.f32 %v649, %v195
      %v683 = vmul.f32 %v653, %v183
      %v684 = vmul.f32 %v653, %v187
      %v685 = vmul.f32 %v653, %v191
      %v686 = vmul.f32 %v653, %v195
      %v687 = vmul.f32 %v657, %v183
      %v688 = vmul.f32 %v657, %v187
      %v689 = vmul.f32 %v657, %v191
      %v690 = vmul.f32 %v657, %v195
      %v691 = vmul.f32 %v661, %v183
      %v692 = vmul.f32 %v661, %v187
      %v693 = vmul.f32 %v661, %v191
      %v694 = vmul.f32 %v661, %v195
      %v695 = vmul.f32 %v665, %v183
      %v696 = vmul.f32 %v665, %v187
      %v697 = vmul.f32 %v665, %v191
      %v698 = vmul.f32 %v665, %v195
      %699 = vset.pattern.permute.xlu0 4
      %700 = vperm.xlu0 %699, %v171
      %v701 = vpop.permute.xlu0 %700
      %703 = vset.pattern.permute.xlu0 4
      %704 = vperm.xlu0 %703, %v172
      %v705 = vpop.permute.xlu0 %704
      %707 = vset.pattern.permute.xlu0 4
      %708 = vperm.xlu0 %707, %v173
      %v709 = vpop.permute.xlu0 %708
      %711 = vset.pattern.permute.xlu0 4
      %712 = vperm.xlu0 %711, %v174
      %v713 = vpop.permute.xlu0 %712
      %715 = vset.pattern.permute.xlu0 4
      %716 = vperm.xlu0 %715, %v175
      %v717 = vpop.permute.xlu0 %716
      %719 = vset.pattern.permute.xlu0 4
      %720 = vperm.xlu0 %719, %v176
      %v721 = vpop.permute.xlu0 %720
      %723 = vset.pattern.permute.xlu0 4
      %724 = vperm.xlu0 %723, %v177
      %v725 = vpop.permute.xlu0 %724
      %727 = vset.pattern.permute.xlu0 4
      %728 = vperm.xlu0 %727, %v178
      %v729 = vpop.permute.xlu0 %728
      %v731 = vadd.f32 %v667, %v701
      %v732 = vadd.f32 %v668, %v701
      %v733 = vadd.f32 %v669, %v701
      %v734 = vadd.f32 %v670, %v701
      %v735 = vadd.f32 %v671, %v705
      %v736 = vadd.f32 %v672, %v705
      %v737 = vadd.f32 %v673, %v705
      %v738 = vadd.f32 %v674, %v705
      %v739 = vadd.f32 %v675, %v709
      %v740 = vadd.f32 %v676, %v709
      %v741 = vadd.f32 %v677, %v709
      %v742 = vadd.f32 %v678, %v709
      %v743 = vadd.f32 %v679, %v713
      %v744 = vadd.f32 %v680, %v713
      %v745 = vadd.f32 %v681, %v713
      %v746 = vadd.f32 %v682, %v713
      %v747 = vadd.f32 %v683, %v717
      %v748 = vadd.f32 %v684, %v717
      %v749 = vadd.f32 %v685, %v717
      %v750 = vadd.f32 %v686, %v717
      %v751 = vadd.f32 %v687, %v721
      %v752 = vadd.f32 %v688, %v721
      %v753 = vadd.f32 %v689, %v721
      %v754 = vadd.f32 %v690, %v721
      %v755 = vadd.f32 %v691, %v725
      %v756 = vadd.f32 %v692, %v725
      %v757 = vadd.f32 %v693, %v725
      %v758 = vadd.f32 %v694, %v725
      %v759 = vadd.f32 %v695, %v729
      %v760 = vadd.f32 %v696, %v729
      %v761 = vadd.f32 %v697, %v729
      %v762 = vadd.f32 %v698, %v729
      %v763 = vadd.f32 %v603, %v731
      %v764 = vadd.f32 %v604, %v732
      %v765 = vadd.f32 %v605, %v733
      %v766 = vadd.f32 %v606, %v734
      %v767 = vadd.f32 %v607, %v735
      %v768 = vadd.f32 %v608, %v736
      %v769 = vadd.f32 %v609, %v737
      %v770 = vadd.f32 %v610, %v738
      %v771 = vadd.f32 %v611, %v739
      %v772 = vadd.f32 %v612, %v740
      %v773 = vadd.f32 %v613, %v741
      %v774 = vadd.f32 %v614, %v742
      %v775 = vadd.f32 %v615, %v743
      %v776 = vadd.f32 %v616, %v744
      %v777 = vadd.f32 %v617, %v745
      %v778 = vadd.f32 %v618, %v746
      %v779 = vadd.f32 %v619, %v747
      %v780 = vadd.f32 %v620, %v748
      %v781 = vadd.f32 %v621, %v749
      %v782 = vadd.f32 %v622, %v750
      %v783 = vadd.f32 %v623, %v751
      %v784 = vadd.f32 %v624, %v752
      %v785 = vadd.f32 %v625, %v753
      %v786 = vadd.f32 %v626, %v754
      %v787 = vadd.f32 %v627, %v755
      %v788 = vadd.f32 %v628, %v756
      %v789 = vadd.f32 %v629, %v757
      %v790 = vadd.f32 %v630, %v758
      %v791 = vadd.f32 %v631, %v759
      %v792 = vadd.f32 %v632, %v760
      %v793 = vadd.f32 %v633, %v761
      %v794 = vadd.f32 %v634, %v762
      %v795 = vmax.f32 %v763, 0.0
      %v796 = vmax.f32 %v764, 0.0
      %v797 = vmax.f32 %v765, 0.0
      %v798 = vmax.f32 %v766, 0.0
      %v799 = vmax.f32 %v767, 0.0
      %v800 = vmax.f32 %v768, 0.0
      %v801 = vmax.f32 %v769, 0.0
      %v802 = vmax.f32 %v770, 0.0
      %v803 = vmax.f32 %v771, 0.0
      %v804 = vmax.f32 %v772, 0.0
      %v805 = vmax.f32 %v773, 0.0
      %v806 = vmax.f32 %v774, 0.0
      %v807 = vmax.f32 %v775, 0.0
      %v808 = vmax.f32 %v776, 0.0
      %v809 = vmax.f32 %v777, 0.0
      %v810 = vmax.f32 %v778, 0.0
      %v811 = vmax.f32 %v779, 0.0
      %v812 = vmax.f32 %v780, 0.0
      %v813 = vmax.f32 %v781, 0.0
      %v814 = vmax.f32 %v782, 0.0
      %v815 = vmax.f32 %v783, 0.0
      %v816 = vmax.f32 %v784, 0.0
      %v817 = vmax.f32 %v785, 0.0
      %v818 = vmax.f32 %v786, 0.0
      %v819 = vmax.f32 %v787, 0.0
      %v820 = vmax.f32 %v788, 0.0
      %v821 = vmax.f32 %v789, 0.0
      %v822 = vmax.f32 %v790, 0.0
      %v823 = vmax.f32 %v791, 0.0
      %v824 = vmax.f32 %v792, 0.0
      %v825 = vmax.f32 %v793, 0.0
      %v826 = vmax.f32 %v794, 0.0
      %s827 = scalar_lea.vmem %s2, 32
      %v828 = vld [vmem:[%s827] sm:$0xf]
      %v829 = vld [vmem:[%s827 + $0x4] sm:$0xf]
      %v830 = vld [vmem:[%s827 + $0x8] sm:$0xf]
      %v831 = vld [vmem:[%s827 + $0xc] sm:$0xf]
      %v832 = vld [vmem:[%s827 + $0x10] sm:$0xf]
      %v833 = vld [vmem:[%s827 + $0x14] sm:$0xf]
      %v834 = vld [vmem:[%s827 + $0x18] sm:$0xf]
      %v835 = vld [vmem:[%s827 + $0x1c] sm:$0xf]
      %v836 = vpack.c.bf16 %v799, %v795
      %v837 = vpack.c.bf16 %v800, %v796
      %v838 = vpack.c.bf16 %v801, %v797
      %v839 = vpack.c.bf16 %v802, %v798
      %v840 = vpack.c.bf16 %v807, %v803
      %v841 = vpack.c.bf16 %v808, %v804
      %v842 = vpack.c.bf16 %v809, %v805
      %v843 = vpack.c.bf16 %v810, %v806
      %v844 = vpack.c.bf16 %v815, %v811
      %v845 = vpack.c.bf16 %v816, %v812
      %v846 = vpack.c.bf16 %v817, %v813
      %v847 = vpack.c.bf16 %v818, %v814
      %v848 = vpack.c.bf16 %v823, %v819
      %v849 = vpack.c.bf16 %v824, %v820
      %v850 = vpack.c.bf16 %v825, %v821
      %v851 = vpack.c.bf16 %v826, %v822
      %852 = vset.pattern.permute.xlu0 5
      %853 = vperm.xlu0 %852, %v171
      %v854 = vpop.permute.xlu0 %853
      %856 = vset.pattern.permute.xlu0 5
      %857 = vperm.xlu0 %856, %v172
      %v858 = vpop.permute.xlu0 %857
      %860 = vset.pattern.permute.xlu0 5
      %861 = vperm.xlu0 %860, %v173
      %v862 = vpop.permute.xlu0 %861
      %864 = vset.pattern.permute.xlu0 5
      %865 = vperm.xlu0 %864, %v174
      %v866 = vpop.permute.xlu0 %865
      %868 = vset.pattern.permute.xlu0 5
      %869 = vperm.xlu0 %868, %v175
      %v870 = vpop.permute.xlu0 %869
      %872 = vset.pattern.permute.xlu0 5
      %873 = vperm.xlu0 %872, %v176
      %v874 = vpop.permute.xlu0 %873
      %876 = vset.pattern.permute.xlu0 5
      %877 = vperm.xlu0 %876, %v177
      %v878 = vpop.permute.xlu0 %877
      %880 = vset.pattern.permute.xlu0 5
      %881 = vperm.xlu0 %880, %v178
      %v882 = vpop.permute.xlu0 %881
      %v892 = vunpack.c.l.b16 %v828
      %v893 = vunpack.c.l.b16 %v829
      %v894 = vunpack.c.l.b16 %v830
      %v895 = vunpack.c.l.b16 %v831
      %v896 = vunpack.c.l.b16 %v832
      %v897 = vunpack.c.l.b16 %v833
      %v898 = vunpack.c.l.b16 %v834
      %v899 = vunpack.c.l.b16 %v835
      %v900 = vpack.c.b16 %v893, %v892
      %v901 = vpack.c.b16 %v895, %v894
      %v902 = vpack.c.b16 %v897, %v896
      %v903 = vpack.c.b16 %v899, %v898
      %v905 = vsel %vm444, %v900, 0
      %v908 = vsel %vm444, %v901, 0
      %v911 = vsel %vm444, %v902, 0
      %v914 = vsel %vm444, %v903, 0
      %916 = vmatprep.subr.bf16.mxu0 0
      %917 = vmatpush1.bf16.msra.mxu0 0
      %918 = vmatprep.subr.bf16.mxu0 0
      %919 = vmatpush1.bf16.msra.mxu0 0
      %920 = vmatprep.subr.bf16.mxu0 0
      %921 = vmatpush1.bf16.msra.mxu0 0
      %922 = vmatprep.subr.bf16.mxu0 0
      %923 = vmatpush1.bf16.msra.mxu0 0
      %924 = vmatprep.subr.bf16.mxu0 %v849
      %925 = vmatpush1.bf16.msra.mxu0 %v848
      %926 = vmatprep.subr.bf16.mxu0 %v845
      %927 = vmatpush1.bf16.msra.mxu0 %v844
      %928 = vmatprep.subr.bf16.mxu0 %v841
      %929 = vmatpush1.bf16.msra.mxu0 %v840
      %930 = vmatprep.subr.bf16.mxu0 %v837
      %931 = vmatpush1.bf16.msra.mxu0 %v836
      %932 = vmatprep.subr.bf16.mxu0 0
      %933 = vmatpush2.bf16.msra.mxu0 0
      %934 = vmatprep.subr.bf16.mxu0 0
      %935 = vmatpush2.bf16.msra.mxu0 0
      %936 = vmatprep.subr.bf16.mxu0 0
      %937 = vmatpush2.bf16.msra.mxu0 0
      %938 = vmatprep.subr.bf16.mxu0 0
      %939 = vmatpush2.bf16.msra.mxu0 0
      %940 = vmatprep.subr.bf16.mxu0 0
      %941 = vmatpush2.bf16.msra.mxu0 0
      %942 = vmatprep.subr.bf16.mxu0 0
      %943 = vmatpush2.bf16.msra.mxu0 0
      %944 = vmatprep.subr.bf16.mxu0 0
      %945 = vmatpush2.bf16.msra.mxu0 0
      %946 = vmatprep.subr.bf16.mxu0 0
      %947 = vmatpush2.bf16.msra.mxu0 0
      %948 = vmatprep.mubr.bf16.mxu0 0
      %949 = vmatmul.mubr.bf16.gmra.mxu0 %v905
      %v950 = vpop.f32.mrf.mxu0
      %v951 = vadd.f32 %v854, %v950
      %v952 = vpop.f32.mrf.mxu0
      %v953 = vadd.f32 %v854, %v952
      %v954 = vpop.f32.mrf.mxu0
      %v955 = vadd.f32 %v858, %v954
      %v956 = vpop.f32.mrf.mxu0
      %v957 = vadd.f32 %v858, %v956
      %958 = vmatprep.mubr.bf16.mxu0 0
      %959 = vmatmul.mubr.bf16.gmra.mxu0 %v908
      %v960 = vpop.f32.mrf.mxu0
      %v961 = vadd.f32 %v862, %v960
      %v962 = vpop.f32.mrf.mxu0
      %v963 = vadd.f32 %v862, %v962
      %v964 = vpop.f32.mrf.mxu0
      %v965 = vadd.f32 %v866, %v964
      %v966 = vpop.f32.mrf.mxu0
      %v967 = vadd.f32 %v866, %v966
      %968 = vmatprep.mubr.bf16.mxu0 0
      %969 = vmatmul.mubr.bf16.gmra.mxu0 %v911
      %v970 = vpop.f32.mrf.mxu0
      %v971 = vadd.f32 %v870, %v970
      %v972 = vpop.f32.mrf.mxu0
      %v973 = vadd.f32 %v870, %v972
      %v974 = vpop.f32.mrf.mxu0
      %v975 = vadd.f32 %v874, %v974
      %v976 = vpop.f32.mrf.mxu0
      %v977 = vadd.f32 %v874, %v976
      %978 = vmatprep.mubr.bf16.mxu0 0
      %979 = vmatmul.mubr.bf16.gmra.mxu0 %v914
      %v980 = vpop.f32.mrf.mxu0
      %v981 = vadd.f32 %v878, %v980
      %v982 = vpop.f32.mrf.mxu0
      %v983 = vadd.f32 %v878, %v982
      %v984 = vpop.f32.mrf.mxu0
      %v985 = vadd.f32 %v882, %v984
      %v986 = vpop.f32.mrf.mxu0
      %v987 = vadd.f32 %v882, %v986
      %988 = vdwg.mxu0
      %989 = vmatprep.subr.bf16.mxu0 0
      %990 = vmatpush1.bf16.msra.mxu0 0
      %991 = vmatprep.subr.bf16.mxu0 0
      %992 = vmatpush1.bf16.msra.mxu0 0
      %993 = vmatprep.subr.bf16.mxu0 0
      %994 = vmatpush1.bf16.msra.mxu0 0
      %995 = vmatprep.subr.bf16.mxu0 0
      %996 = vmatpush1.bf16.msra.mxu0 0
      %997 = vmatprep.subr.bf16.mxu0 %v851
      %998 = vmatpush1.bf16.msra.mxu0 %v850
      %999 = vmatprep.subr.bf16.mxu0 %v847
      %1000 = vmatpush1.bf16.msra.mxu0 %v846
      %1001 = vmatprep.subr.bf16.mxu0 %v843
      %1002 = vmatpush1.bf16.msra.mxu0 %v842
      %1003 = vmatprep.subr.bf16.mxu0 %v839
      %1004 = vmatpush1.bf16.msra.mxu0 %v838
      %1005 = vmatprep.subr.bf16.mxu0 0
      %1006 = vmatpush2.bf16.msra.mxu0 0
      %1007 = vmatprep.subr.bf16.mxu0 0
      %1008 = vmatpush2.bf16.msra.mxu0 0
      %1009 = vmatprep.subr.bf16.mxu0 0
      %1010 = vmatpush2.bf16.msra.mxu0 0
      %1011 = vmatprep.subr.bf16.mxu0 0
      %1012 = vmatpush2.bf16.msra.mxu0 0
      %1013 = vmatprep.subr.bf16.mxu0 0
      %1014 = vmatpush2.bf16.msra.mxu0 0
      %1015 = vmatprep.subr.bf16.mxu0 0
      %1016 = vmatpush2.bf16.msra.mxu0 0
      %1017 = vmatprep.subr.bf16.mxu0 0
      %1018 = vmatpush2.bf16.msra.mxu0 0
      %1019 = vmatprep.subr.bf16.mxu0 0
      %1020 = vmatpush2.bf16.msra.mxu0 0
      %1021 = vmatprep.mubr.bf16.mxu0 0
      %1022 = vmatmul.mubr.bf16.gmra.mxu0 %v905
      %v1023 = vpop.f32.mrf.mxu0
      %v1024 = vadd.f32 %v854, %v1023
      %v1025 = vpop.f32.mrf.mxu0
      %v1026 = vadd.f32 %v854, %v1025
      %v1027 = vpop.f32.mrf.mxu0
      %v1028 = vadd.f32 %v858, %v1027
      %v1029 = vpop.f32.mrf.mxu0
      %v1030 = vadd.f32 %v858, %v1029
      %1031 = vmatprep.mubr.bf16.mxu0 0
      %1032 = vmatmul.mubr.bf16.gmra.mxu0 %v908
      %v1033 = vpop.f32.mrf.mxu0
      %v1034 = vadd.f32 %v862, %v1033
      %v1035 = vpop.f32.mrf.mxu0
      %v1036 = vadd.f32 %v862, %v1035
      %v1037 = vpop.f32.mrf.mxu0
      %v1038 = vadd.f32 %v866, %v1037
      %v1039 = vpop.f32.mrf.mxu0
      %v1040 = vadd.f32 %v866, %v1039
      %1041 = vmatprep.mubr.bf16.mxu0 0
      %1042 = vmatmul.mubr.bf16.gmra.mxu0 %v911
      %v1043 = vpop.f32.mrf.mxu0
      %v1044 = vadd.f32 %v870, %v1043
      %v1045 = vpop.f32.mrf.mxu0
      %v1046 = vadd.f32 %v870, %v1045
      %v1047 = vpop.f32.mrf.mxu0
      %v1048 = vadd.f32 %v874, %v1047
      %v1049 = vpop.f32.mrf.mxu0
      %v1050 = vadd.f32 %v874, %v1049
      %1051 = vmatprep.mubr.bf16.mxu0 0
      %1052 = vmatmul.mubr.bf16.gmra.mxu0 %v914
      %v1053 = vpop.f32.mrf.mxu0
      %v1054 = vadd.f32 %v878, %v1053
      %v1055 = vpop.f32.mrf.mxu0
      %v1056 = vadd.f32 %v878, %v1055
      %v1057 = vpop.f32.mrf.mxu0
      %v1058 = vadd.f32 %v882, %v1057
      %v1059 = vpop.f32.mrf.mxu0
      %v1060 = vadd.f32 %v882, %v1059
      %1061 = vdwg.mxu0
      %v1062 = vmax.f32 %v951, 0.0
      %v1063 = vmax.f32 %v953, 0.0
      %v1064 = vmax.f32 %v1024, 0.0
      %v1065 = vmax.f32 %v1026, 0.0
      %v1066 = vmax.f32 %v955, 0.0
      %v1067 = vmax.f32 %v957, 0.0
      %v1068 = vmax.f32 %v1028, 0.0
      %v1069 = vmax.f32 %v1030, 0.0
      %v1070 = vmax.f32 %v961, 0.0
      %v1071 = vmax.f32 %v963, 0.0
      %v1072 = vmax.f32 %v1034, 0.0
      %v1073 = vmax.f32 %v1036, 0.0
      %v1074 = vmax.f32 %v965, 0.0
      %v1075 = vmax.f32 %v967, 0.0
      %v1076 = vmax.f32 %v1038, 0.0
      %v1077 = vmax.f32 %v1040, 0.0
      %v1078 = vmax.f32 %v971, 0.0
      %v1079 = vmax.f32 %v973, 0.0
      %v1080 = vmax.f32 %v1044, 0.0
      %v1081 = vmax.f32 %v1046, 0.0
      %v1082 = vmax.f32 %v975, 0.0
      %v1083 = vmax.f32 %v977, 0.0
      %v1084 = vmax.f32 %v1048, 0.0
      %v1085 = vmax.f32 %v1050, 0.0
      %v1086 = vmax.f32 %v981, 0.0
      %v1087 = vmax.f32 %v983, 0.0
      %v1088 = vmax.f32 %v1054, 0.0
      %v1089 = vmax.f32 %v1056, 0.0
      %v1090 = vmax.f32 %v985, 0.0
      %v1091 = vmax.f32 %v987, 0.0
      %v1092 = vmax.f32 %v1058, 0.0
      %v1093 = vmax.f32 %v1060, 0.0
      %1094 = vset.pattern.permute.xlu0 6
      %1095 = vperm.xlu0 %1094, %v171
      %v1096 = vpop.permute.xlu0 %1095
      %1098 = vset.pattern.permute.xlu0 6
      %1099 = vperm.xlu0 %1098, %v172
      %v1100 = vpop.permute.xlu0 %1099
      %1102 = vset.pattern.permute.xlu0 6
      %1103 = vperm.xlu0 %1102, %v173
      %v1104 = vpop.permute.xlu0 %1103
      %1106 = vset.pattern.permute.xlu0 6
      %1107 = vperm.xlu0 %1106, %v174
      %v1108 = vpop.permute.xlu0 %1107
      %1110 = vset.pattern.permute.xlu0 6
      %1111 = vperm.xlu0 %1110, %v175
      %v1112 = vpop.permute.xlu0 %1111
      %1114 = vset.pattern.permute.xlu0 6
      %1115 = vperm.xlu0 %1114, %v176
      %v1116 = vpop.permute.xlu0 %1115
      %1118 = vset.pattern.permute.xlu0 6
      %1119 = vperm.xlu0 %1118, %v177
      %v1120 = vpop.permute.xlu0 %1119
      %1122 = vset.pattern.permute.xlu0 6
      %1123 = vperm.xlu0 %1122, %v178
      %v1124 = vpop.permute.xlu0 %1123
      %v1126 = vmul.f32 %v1096, %v183
      %v1127 = vmul.f32 %v1096, %v187
      %v1128 = vmul.f32 %v1096, %v191
      %v1129 = vmul.f32 %v1096, %v195
      %v1130 = vmul.f32 %v1100, %v183
      %v1131 = vmul.f32 %v1100, %v187
      %v1132 = vmul.f32 %v1100, %v191
      %v1133 = vmul.f32 %v1100, %v195
      %v1134 = vmul.f32 %v1104, %v183
      %v1135 = vmul.f32 %v1104, %v187
      %v1136 = vmul.f32 %v1104, %v191
      %v1137 = vmul.f32 %v1104, %v195
      %v1138 = vmul.f32 %v1108, %v183
      %v1139 = vmul.f32 %v1108, %v187
      %v1140 = vmul.f32 %v1108, %v191
      %v1141 = vmul.f32 %v1108, %v195
      %v1142 = vmul.f32 %v1112, %v183
      %v1143 = vmul.f32 %v1112, %v187
      %v1144 = vmul.f32 %v1112, %v191
      %v1145 = vmul.f32 %v1112, %v195
      %v1146 = vmul.f32 %v1116, %v183
      %v1147 = vmul.f32 %v1116, %v187
      %v1148 = vmul.f32 %v1116, %v191
      %v1149 = vmul.f32 %v1116, %v195
      %v1150 = vmul.f32 %v1120, %v183
      %v1151 = vmul.f32 %v1120, %v187
      %v1152 = vmul.f32 %v1120, %v191
      %v1153 = vmul.f32 %v1120, %v195
      %v1154 = vmul.f32 %v1124, %v183
      %v1155 = vmul.f32 %v1124, %v187
      %v1156 = vmul.f32 %v1124, %v191
      %v1157 = vmul.f32 %v1124, %v195
      %1158 = vset.pattern.permute.xlu0 7
      %1159 = vperm.xlu0 %1158, %v171
      %v1160 = vpop.permute.xlu0 %1159
      %1162 = vset.pattern.permute.xlu0 7
      %1163 = vperm.xlu0 %1162, %v172
      %v1164 = vpop.permute.xlu0 %1163
      %1166 = vset.pattern.permute.xlu0 7
      %1167 = vperm.xlu0 %1166, %v173
      %v1168 = vpop.permute.xlu0 %1167
      %1170 = vset.pattern.permute.xlu0 7
      %1171 = vperm.xlu0 %1170, %v174
      %v1172 = vpop.permute.xlu0 %1171
      %1174 = vset.pattern.permute.xlu0 7
      %1175 = vperm.xlu0 %1174, %v175
      %v1176 = vpop.permute.xlu0 %1175
      %1178 = vset.pattern.permute.xlu0 7
      %1179 = vperm.xlu0 %1178, %v176
      %v1180 = vpop.permute.xlu0 %1179
      %1182 = vset.pattern.permute.xlu0 7
      %1183 = vperm.xlu0 %1182, %v177
      %v1184 = vpop.permute.xlu0 %1183
      %1186 = vset.pattern.permute.xlu0 7
      %1187 = vperm.xlu0 %1186, %v178
      %v1188 = vpop.permute.xlu0 %1187
      %v1190 = vadd.f32 %v1126, %v1160
      %v1191 = vadd.f32 %v1127, %v1160
      %v1192 = vadd.f32 %v1128, %v1160
      %v1193 = vadd.f32 %v1129, %v1160
      %v1194 = vadd.f32 %v1130, %v1164
      %v1195 = vadd.f32 %v1131, %v1164
      %v1196 = vadd.f32 %v1132, %v1164
      %v1197 = vadd.f32 %v1133, %v1164
      %v1198 = vadd.f32 %v1134, %v1168
      %v1199 = vadd.f32 %v1135, %v1168
      %v1200 = vadd.f32 %v1136, %v1168
      %v1201 = vadd.f32 %v1137, %v1168
      %v1202 = vadd.f32 %v1138, %v1172
      %v1203 = vadd.f32 %v1139, %v1172
      %v1204 = vadd.f32 %v1140, %v1172
      %v1205 = vadd.f32 %v1141, %v1172
      %v1206 = vadd.f32 %v1142, %v1176
      %v1207 = vadd.f32 %v1143, %v1176
      %v1208 = vadd.f32 %v1144, %v1176
      %v1209 = vadd.f32 %v1145, %v1176
      %v1210 = vadd.f32 %v1146, %v1180
      %v1211 = vadd.f32 %v1147, %v1180
      %v1212 = vadd.f32 %v1148, %v1180
      %v1213 = vadd.f32 %v1149, %v1180
      %v1214 = vadd.f32 %v1150, %v1184
      %v1215 = vadd.f32 %v1151, %v1184
      %v1216 = vadd.f32 %v1152, %v1184
      %v1217 = vadd.f32 %v1153, %v1184
      %v1218 = vadd.f32 %v1154, %v1188
      %v1219 = vadd.f32 %v1155, %v1188
      %v1220 = vadd.f32 %v1156, %v1188
      %v1221 = vadd.f32 %v1157, %v1188
      %v1222 = vadd.f32 %v1062, %v1190
      %v1223 = vadd.f32 %v1063, %v1191
      %v1224 = vadd.f32 %v1064, %v1192
      %v1225 = vadd.f32 %v1065, %v1193
      %v1226 = vadd.f32 %v1066, %v1194
      %v1227 = vadd.f32 %v1067, %v1195
      %v1228 = vadd.f32 %v1068, %v1196
      %v1229 = vadd.f32 %v1069, %v1197
      %v1230 = vadd.f32 %v1070, %v1198
      %v1231 = vadd.f32 %v1071, %v1199
      %v1232 = vadd.f32 %v1072, %v1200
      %v1233 = vadd.f32 %v1073, %v1201
      %v1234 = vadd.f32 %v1074, %v1202
      %v1235 = vadd.f32 %v1075, %v1203
      %v1236 = vadd.f32 %v1076, %v1204
      %v1237 = vadd.f32 %v1077, %v1205
      %v1238 = vadd.f32 %v1078, %v1206
      %v1239 = vadd.f32 %v1079, %v1207
      %v1240 = vadd.f32 %v1080, %v1208
      %v1241 = vadd.f32 %v1081, %v1209
      %v1242 = vadd.f32 %v1082, %v1210
      %v1243 = vadd.f32 %v1083, %v1211
      %v1244 = vadd.f32 %v1084, %v1212
      %v1245 = vadd.f32 %v1085, %v1213
      %v1246 = vadd.f32 %v1086, %v1214
      %v1247 = vadd.f32 %v1087, %v1215
      %v1248 = vadd.f32 %v1088, %v1216
      %v1249 = vadd.f32 %v1089, %v1217
      %v1250 = vadd.f32 %v1090, %v1218
      %v1251 = vadd.f32 %v1091, %v1219
      %v1252 = vadd.f32 %v1092, %v1220
      %v1253 = vadd.f32 %v1093, %v1221
      %v1254 = vmax.f32 %v1222, 0.0
      %v1255 = vmax.f32 %v1223, 0.0
      %v1256 = vmax.f32 %v1224, 0.0
      %v1257 = vmax.f32 %v1225, 0.0
      %v1258 = vmax.f32 %v1226, 0.0
      %v1259 = vmax.f32 %v1227, 0.0
      %v1260 = vmax.f32 %v1228, 0.0
      %v1261 = vmax.f32 %v1229, 0.0
      %v1262 = vmax.f32 %v1230, 0.0
      %v1263 = vmax.f32 %v1231, 0.0
      %v1264 = vmax.f32 %v1232, 0.0
      %v1265 = vmax.f32 %v1233, 0.0
      %v1266 = vmax.f32 %v1234, 0.0
      %v1267 = vmax.f32 %v1235, 0.0
      %v1268 = vmax.f32 %v1236, 0.0
      %v1269 = vmax.f32 %v1237, 0.0
      %v1270 = vmax.f32 %v1238, 0.0
      %v1271 = vmax.f32 %v1239, 0.0
      %v1272 = vmax.f32 %v1240, 0.0
      %v1273 = vmax.f32 %v1241, 0.0
      %v1274 = vmax.f32 %v1242, 0.0
      %v1275 = vmax.f32 %v1243, 0.0
      %v1276 = vmax.f32 %v1244, 0.0
      %v1277 = vmax.f32 %v1245, 0.0
      %v1278 = vmax.f32 %v1246, 0.0
      %v1279 = vmax.f32 %v1247, 0.0
      %v1280 = vmax.f32 %v1248, 0.0
      %v1281 = vmax.f32 %v1249, 0.0
      %v1282 = vmax.f32 %v1250, 0.0
      %v1283 = vmax.f32 %v1251, 0.0
      %v1284 = vmax.f32 %v1252, 0.0
      %v1285 = vmax.f32 %v1253, 0.0
      %s1286 = scalar_lea.vmem %s2, 64
      %v1287 = vld [vmem:[%s1286] sm:$0xf]
      %v1288 = vld [vmem:[%s1286 + $0x4] sm:$0xf]
      %v1289 = vld [vmem:[%s1286 + $0x8] sm:$0xf]
      %v1290 = vld [vmem:[%s1286 + $0xc] sm:$0xf]
      %v1291 = vld [vmem:[%s1286 + $0x10] sm:$0xf]
      %v1292 = vld [vmem:[%s1286 + $0x14] sm:$0xf]
      %v1293 = vld [vmem:[%s1286 + $0x18] sm:$0xf]
      %v1294 = vld [vmem:[%s1286 + $0x1c] sm:$0xf]
      %v1295 = vpack.c.bf16 %v1258, %v1254
      %v1296 = vpack.c.bf16 %v1259, %v1255
      %v1297 = vpack.c.bf16 %v1260, %v1256
      %v1298 = vpack.c.bf16 %v1261, %v1257
      %v1299 = vpack.c.bf16 %v1266, %v1262
      %v1300 = vpack.c.bf16 %v1267, %v1263
      %v1301 = vpack.c.bf16 %v1268, %v1264
      %v1302 = vpack.c.bf16 %v1269, %v1265
      %v1303 = vpack.c.bf16 %v1274, %v1270
      %v1304 = vpack.c.bf16 %v1275, %v1271
      %v1305 = vpack.c.bf16 %v1276, %v1272
      %v1306 = vpack.c.bf16 %v1277, %v1273
      %v1307 = vpack.c.bf16 %v1282, %v1278
      %v1308 = vpack.c.bf16 %v1283, %v1279
      %v1309 = vpack.c.bf16 %v1284, %v1280
      %v1310 = vpack.c.bf16 %v1285, %v1281
      %1311 = vset.pattern.permute.xlu0 8
      %1312 = vperm.xlu0 %1311, %v171
      %v1313 = vpop.permute.xlu0 %1312
      %1315 = vset.pattern.permute.xlu0 8
      %1316 = vperm.xlu0 %1315, %v172
      %v1317 = vpop.permute.xlu0 %1316
      %1319 = vset.pattern.permute.xlu0 8
      %1320 = vperm.xlu0 %1319, %v173
      %v1321 = vpop.permute.xlu0 %1320
      %1323 = vset.pattern.permute.xlu0 8
      %1324 = vperm.xlu0 %1323, %v174
      %v1325 = vpop.permute.xlu0 %1324
      %1327 = vset.pattern.permute.xlu0 8
      %1328 = vperm.xlu0 %1327, %v175
      %v1329 = vpop.permute.xlu0 %1328
      %1331 = vset.pattern.permute.xlu0 8
      %1332 = vperm.xlu0 %1331, %v176
      %v1333 = vpop.permute.xlu0 %1332
      %1335 = vset.pattern.permute.xlu0 8
      %1336 = vperm.xlu0 %1335, %v177
      %v1337 = vpop.permute.xlu0 %1336
      %1339 = vset.pattern.permute.xlu0 8
      %1340 = vperm.xlu0 %1339, %v178
      %v1341 = vpop.permute.xlu0 %1340
      %v1351 = vunpack.c.l.b16 %v1287
      %v1352 = vunpack.c.l.b16 %v1288
      %v1353 = vunpack.c.l.b16 %v1289
      %v1354 = vunpack.c.l.b16 %v1290
      %v1355 = vunpack.c.l.b16 %v1291
      %v1356 = vunpack.c.l.b16 %v1292
      %v1357 = vunpack.c.l.b16 %v1293
      %v1358 = vunpack.c.l.b16 %v1294
      %v1359 = vpack.c.b16 %v1352, %v1351
      %v1360 = vpack.c.b16 %v1354, %v1353
      %v1361 = vpack.c.b16 %v1356, %v1355
      %v1362 = vpack.c.b16 %v1358, %v1357
      %v1364 = vsel %vm444, %v1359, 0
      %v1367 = vsel %vm444, %v1360, 0
      %v1370 = vsel %vm444, %v1361, 0
      %v1373 = vsel %vm444, %v1362, 0
      %1375 = vmatprep.subr.bf16.mxu0 0
      %1376 = vmatpush1.bf16.msra.mxu0 0
      %1377 = vmatprep.subr.bf16.mxu0 0
      %1378 = vmatpush1.bf16.msra.mxu0 0
      %1379 = vmatprep.subr.bf16.mxu0 0
      %1380 = vmatpush1.bf16.msra.mxu0 0
      %1381 = vmatprep.subr.bf16.mxu0 0
      %1382 = vmatpush1.bf16.msra.mxu0 0
      %1383 = vmatprep.subr.bf16.mxu0 %v1308
      %1384 = vmatpush1.bf16.msra.mxu0 %v1307
      %1385 = vmatprep.subr.bf16.mxu0 %v1304
      %1386 = vmatpush1.bf16.msra.mxu0 %v1303
      %1387 = vmatprep.subr.bf16.mxu0 %v1300
      %1388 = vmatpush1.bf16.msra.mxu0 %v1299
      %1389 = vmatprep.subr.bf16.mxu0 %v1296
      %1390 = vmatpush1.bf16.msra.mxu0 %v1295
      %1391 = vmatprep.subr.bf16.mxu0 0
      %1392 = vmatpush2.bf16.msra.mxu0 0
      %1393 = vmatprep.subr.bf16.mxu0 0
      %1394 = vmatpush2.bf16.msra.mxu0 0
      %1395 = vmatprep.subr.bf16.mxu0 0
      %1396 = vmatpush2.bf16.msra.mxu0 0
      %1397 = vmatprep.subr.bf16.mxu0 0
      %1398 = vmatpush2.bf16.msra.mxu0 0
      %1399 = vmatprep.subr.bf16.mxu0 0
      %1400 = vmatpush2.bf16.msra.mxu0 0
      %1401 = vmatprep.subr.bf16.mxu0 0
      %1402 = vmatpush2.bf16.msra.mxu0 0
      %1403 = vmatprep.subr.bf16.mxu0 0
      %1404 = vmatpush2.bf16.msra.mxu0 0
      %1405 = vmatprep.subr.bf16.mxu0 0
      %1406 = vmatpush2.bf16.msra.mxu0 0
      %1407 = vmatprep.mubr.bf16.mxu0 0
      %1408 = vmatmul.mubr.bf16.gmra.mxu0 %v1364
      %v1409 = vpop.f32.mrf.mxu0
      %v1410 = vadd.f32 %v1313, %v1409
      %v1411 = vpop.f32.mrf.mxu0
      %v1412 = vadd.f32 %v1313, %v1411
      %v1413 = vpop.f32.mrf.mxu0
      %v1414 = vadd.f32 %v1317, %v1413
      %v1415 = vpop.f32.mrf.mxu0
      %v1416 = vadd.f32 %v1317, %v1415
      %1417 = vmatprep.mubr.bf16.mxu0 0
      %1418 = vmatmul.mubr.bf16.gmra.mxu0 %v1367
      %v1419 = vpop.f32.mrf.mxu0
      %v1420 = vadd.f32 %v1321, %v1419
      %v1421 = vpop.f32.mrf.mxu0
      %v1422 = vadd.f32 %v1321, %v1421
      %v1423 = vpop.f32.mrf.mxu0
      %v1424 = vadd.f32 %v1325, %v1423
      %v1425 = vpop.f32.mrf.mxu0
      %v1426 = vadd.f32 %v1325, %v1425
      %1427 = vmatprep.mubr.bf16.mxu0 0
      %1428 = vmatmul.mubr.bf16.gmra.mxu0 %v1370
      %v1429 = vpop.f32.mrf.mxu0
      %v1430 = vadd.f32 %v1329, %v1429
      %v1431 = vpop.f32.mrf.mxu0
      %v1432 = vadd.f32 %v1329, %v1431
      %v1433 = vpop.f32.mrf.mxu0
      %v1434 = vadd.f32 %v1333, %v1433
      %v1435 = vpop.f32.mrf.mxu0
      %v1436 = vadd.f32 %v1333, %v1435
      %1437 = vmatprep.mubr.bf16.mxu0 0
      %1438 = vmatmul.mubr.bf16.gmra.mxu0 %v1373
      %v1439 = vpop.f32.mrf.mxu0
      %v1440 = vadd.f32 %v1337, %v1439
      %v1441 = vpop.f32.mrf.mxu0
      %v1442 = vadd.f32 %v1337, %v1441
      %v1443 = vpop.f32.mrf.mxu0
      %v1444 = vadd.f32 %v1341, %v1443
      %v1445 = vpop.f32.mrf.mxu0
      %v1446 = vadd.f32 %v1341, %v1445
      %1447 = vdwg.mxu0
      %1448 = vmatprep.subr.bf16.mxu0 0
      %1449 = vmatpush1.bf16.msra.mxu0 0
      %1450 = vmatprep.subr.bf16.mxu0 0
      %1451 = vmatpush1.bf16.msra.mxu0 0
      %1452 = vmatprep.subr.bf16.mxu0 0
      %1453 = vmatpush1.bf16.msra.mxu0 0
      %1454 = vmatprep.subr.bf16.mxu0 0
      %1455 = vmatpush1.bf16.msra.mxu0 0
      %1456 = vmatprep.subr.bf16.mxu0 %v1310
      %1457 = vmatpush1.bf16.msra.mxu0 %v1309
      %1458 = vmatprep.subr.bf16.mxu0 %v1306
      %1459 = vmatpush1.bf16.msra.mxu0 %v1305
      %1460 = vmatprep.subr.bf16.mxu0 %v1302
      %1461 = vmatpush1.bf16.msra.mxu0 %v1301
      %1462 = vmatprep.subr.bf16.mxu0 %v1298
      %1463 = vmatpush1.bf16.msra.mxu0 %v1297
      %1464 = vmatprep.subr.bf16.mxu0 0
      %1465 = vmatpush2.bf16.msra.mxu0 0
      %1466 = vmatprep.subr.bf16.mxu0 0
      %1467 = vmatpush2.bf16.msra.mxu0 0
      %1468 = vmatprep.subr.bf16.mxu0 0
      %1469 = vmatpush2.bf16.msra.mxu0 0
      %1470 = vmatprep.subr.bf16.mxu0 0
      %1471 = vmatpush2.bf16.msra.mxu0 0
      %1472 = vmatprep.subr.bf16.mxu0 0
      %1473 = vmatpush2.bf16.msra.mxu0 0
      %1474 = vmatprep.subr.bf16.mxu0 0
      %1475 = vmatpush2.bf16.msra.mxu0 0
      %1476 = vmatprep.subr.bf16.mxu0 0
      %1477 = vmatpush2.bf16.msra.mxu0 0
      %1478 = vmatprep.subr.bf16.mxu0 0
      %1479 = vmatpush2.bf16.msra.mxu0 0
      %1480 = vmatprep.mubr.bf16.mxu0 0
      %1481 = vmatmul.mubr.bf16.gmra.mxu0 %v1364
      %v1482 = vpop.f32.mrf.mxu0
      %v1483 = vadd.f32 %v1313, %v1482
      %v1484 = vpop.f32.mrf.mxu0
      %v1485 = vadd.f32 %v1313, %v1484
      %v1486 = vpop.f32.mrf.mxu0
      %v1487 = vadd.f32 %v1317, %v1486
      %v1488 = vpop.f32.mrf.mxu0
      %v1489 = vadd.f32 %v1317, %v1488
      %1490 = vmatprep.mubr.bf16.mxu0 0
      %1491 = vmatmul.mubr.bf16.gmra.mxu0 %v1367
      %v1492 = vpop.f32.mrf.mxu0
      %v1493 = vadd.f32 %v1321, %v1492
      %v1494 = vpop.f32.mrf.mxu0
      %v1495 = vadd.f32 %v1321, %v1494
      %v1496 = vpop.f32.mrf.mxu0
      %v1497 = vadd.f32 %v1325, %v1496
      %v1498 = vpop.f32.mrf.mxu0
      %v1499 = vadd.f32 %v1325, %v1498
      %1500 = vmatprep.mubr.bf16.mxu0 0
      %1501 = vmatmul.mubr.bf16.gmra.mxu0 %v1370
      %v1502 = vpop.f32.mrf.mxu0
      %v1503 = vadd.f32 %v1329, %v1502
      %v1504 = vpop.f32.mrf.mxu0
      %v1505 = vadd.f32 %v1329, %v1504
      %v1506 = vpop.f32.mrf.mxu0
      %v1507 = vadd.f32 %v1333, %v1506
      %v1508 = vpop.f32.mrf.mxu0
      %v1509 = vadd.f32 %v1333, %v1508
      %1510 = vmatprep.mubr.bf16.mxu0 0
      %1511 = vmatmul.mubr.bf16.gmra.mxu0 %v1373
      %v1512 = vpop.f32.mrf.mxu0
      %v1513 = vadd.f32 %v1337, %v1512
      %v1514 = vpop.f32.mrf.mxu0
      %v1515 = vadd.f32 %v1337, %v1514
      %v1516 = vpop.f32.mrf.mxu0
      %v1517 = vadd.f32 %v1341, %v1516
      %v1518 = vpop.f32.mrf.mxu0
      %v1519 = vadd.f32 %v1341, %v1518
      %1520 = vdwg.mxu0
      %v1521 = vmax.f32 %v1410, 0.0
      %v1522 = vmax.f32 %v1412, 0.0
      %v1523 = vmax.f32 %v1483, 0.0
      %v1524 = vmax.f32 %v1485, 0.0
      %v1525 = vmax.f32 %v1414, 0.0
      %v1526 = vmax.f32 %v1416, 0.0
      %v1527 = vmax.f32 %v1487, 0.0
      %v1528 = vmax.f32 %v1489, 0.0
      %v1529 = vmax.f32 %v1420, 0.0
      %v1530 = vmax.f32 %v1422, 0.0
      %v1531 = vmax.f32 %v1493, 0.0
      %v1532 = vmax.f32 %v1495, 0.0
      %v1533 = vmax.f32 %v1424, 0.0
      %v1534 = vmax.f32 %v1426, 0.0
      %v1535 = vmax.f32 %v1497, 0.0
      %v1536 = vmax.f32 %v1499, 0.0
      %v1537 = vmax.f32 %v1430, 0.0
      %v1538 = vmax.f32 %v1432, 0.0
      %v1539 = vmax.f32 %v1503, 0.0
      %v1540 = vmax.f32 %v1505, 0.0
      %v1541 = vmax.f32 %v1434, 0.0
      %v1542 = vmax.f32 %v1436, 0.0
      %v1543 = vmax.f32 %v1507, 0.0
      %v1544 = vmax.f32 %v1509, 0.0
      %v1545 = vmax.f32 %v1440, 0.0
      %v1546 = vmax.f32 %v1442, 0.0
      %v1547 = vmax.f32 %v1513, 0.0
      %v1548 = vmax.f32 %v1515, 0.0
      %v1549 = vmax.f32 %v1444, 0.0
      %v1550 = vmax.f32 %v1446, 0.0
      %v1551 = vmax.f32 %v1517, 0.0
      %v1552 = vmax.f32 %v1519, 0.0
      %1553 = vset.pattern.permute.xlu0 9
      %1554 = vperm.xlu0 %1553, %v171
      %v1555 = vpop.permute.xlu0 %1554
      %1557 = vset.pattern.permute.xlu0 9
      %1558 = vperm.xlu0 %1557, %v172
      %v1559 = vpop.permute.xlu0 %1558
      %1561 = vset.pattern.permute.xlu0 9
      %1562 = vperm.xlu0 %1561, %v173
      %v1563 = vpop.permute.xlu0 %1562
      %1565 = vset.pattern.permute.xlu0 9
      %1566 = vperm.xlu0 %1565, %v174
      %v1567 = vpop.permute.xlu0 %1566
      %1569 = vset.pattern.permute.xlu0 9
      %1570 = vperm.xlu0 %1569, %v175
      %v1571 = vpop.permute.xlu0 %1570
      %1573 = vset.pattern.permute.xlu0 9
      %1574 = vperm.xlu0 %1573, %v176
      %v1575 = vpop.permute.xlu0 %1574
      %1577 = vset.pattern.permute.xlu0 9
      %1578 = vperm.xlu0 %1577, %v177
      %v1579 = vpop.permute.xlu0 %1578
      %1581 = vset.pattern.permute.xlu0 9
      %1582 = vperm.xlu0 %1581, %v178
      %v1583 = vpop.permute.xlu0 %1582
      %v1585 = vmul.f32 %v1555, %v183
      %v1586 = vmul.f32 %v1555, %v187
      %v1587 = vmul.f32 %v1555, %v191
      %v1588 = vmul.f32 %v1555, %v195
      %v1589 = vmul.f32 %v1559, %v183
      %v1590 = vmul.f32 %v1559, %v187
      %v1591 = vmul.f32 %v1559, %v191
      %v1592 = vmul.f32 %v1559, %v195
      %v1593 = vmul.f32 %v1563, %v183
      %v1594 = vmul.f32 %v1563, %v187
      %v1595 = vmul.f32 %v1563, %v191
      %v1596 = vmul.f32 %v1563, %v195
      %v1597 = vmul.f32 %v1567, %v183
      %v1598 = vmul.f32 %v1567, %v187
      %v1599 = vmul.f32 %v1567, %v191
      %v1600 = vmul.f32 %v1567, %v195
      %v1601 = vmul.f32 %v1571, %v183
      %v1602 = vmul.f32 %v1571, %v187
      %v1603 = vmul.f32 %v1571, %v191
      %v1604 = vmul.f32 %v1571, %v195
      %v1605 = vmul.f32 %v1575, %v183
      %v1606 = vmul.f32 %v1575, %v187
      %v1607 = vmul.f32 %v1575, %v191
      %v1608 = vmul.f32 %v1575, %v195
      %v1609 = vmul.f32 %v1579, %v183
      %v1610 = vmul.f32 %v1579, %v187
      %v1611 = vmul.f32 %v1579, %v191
      %v1612 = vmul.f32 %v1579, %v195
      %v1613 = vmul.f32 %v1583, %v183
      %v1614 = vmul.f32 %v1583, %v187
      %v1615 = vmul.f32 %v1583, %v191
      %v1616 = vmul.f32 %v1583, %v195
      %1617 = vset.pattern.permute.xlu0 10
      %1618 = vperm.xlu0 %1617, %v171
      %v1619 = vpop.permute.xlu0 %1618
      %1621 = vset.pattern.permute.xlu0 10
      %1622 = vperm.xlu0 %1621, %v172
      %v1623 = vpop.permute.xlu0 %1622
      %1625 = vset.pattern.permute.xlu0 10
      %1626 = vperm.xlu0 %1625, %v173
      %v1627 = vpop.permute.xlu0 %1626
      %1629 = vset.pattern.permute.xlu0 10
      %1630 = vperm.xlu0 %1629, %v174
      %v1631 = vpop.permute.xlu0 %1630
      %1633 = vset.pattern.permute.xlu0 10
      %1634 = vperm.xlu0 %1633, %v175
      %v1635 = vpop.permute.xlu0 %1634
      %1637 = vset.pattern.permute.xlu0 10
      %1638 = vperm.xlu0 %1637, %v176
      %v1639 = vpop.permute.xlu0 %1638
      %1641 = vset.pattern.permute.xlu0 10
      %1642 = vperm.xlu0 %1641, %v177
      %v1643 = vpop.permute.xlu0 %1642
      %1645 = vset.pattern.permute.xlu0 10
      %1646 = vperm.xlu0 %1645, %v178
      %v1647 = vpop.permute.xlu0 %1646
      %v1649 = vadd.f32 %v1585, %v1619
      %v1650 = vadd.f32 %v1586, %v1619
      %v1651 = vadd.f32 %v1587, %v1619
      %v1652 = vadd.f32 %v1588, %v1619
      %v1653 = vadd.f32 %v1589, %v1623
      %v1654 = vadd.f32 %v1590, %v1623
      %v1655 = vadd.f32 %v1591, %v1623
      %v1656 = vadd.f32 %v1592, %v1623
      %v1657 = vadd.f32 %v1593, %v1627
      %v1658 = vadd.f32 %v1594, %v1627
      %v1659 = vadd.f32 %v1595, %v1627
      %v1660 = vadd.f32 %v1596, %v1627
      %v1661 = vadd.f32 %v1597, %v1631
      %v1662 = vadd.f32 %v1598, %v1631
      %v1663 = vadd.f32 %v1599, %v1631
      %v1664 = vadd.f32 %v1600, %v1631
      %v1665 = vadd.f32 %v1601, %v1635
      %v1666 = vadd.f32 %v1602, %v1635
      %v1667 = vadd.f32 %v1603, %v1635
      %v1668 = vadd.f32 %v1604, %v1635
      %v1669 = vadd.f32 %v1605, %v1639
      %v1670 = vadd.f32 %v1606, %v1639
      %v1671 = vadd.f32 %v1607, %v1639
      %v1672 = vadd.f32 %v1608, %v1639
      %v1673 = vadd.f32 %v1609, %v1643
      %v1674 = vadd.f32 %v1610, %v1643
      %v1675 = vadd.f32 %v1611, %v1643
      %v1676 = vadd.f32 %v1612, %v1643
      %v1677 = vadd.f32 %v1613, %v1647
      %v1678 = vadd.f32 %v1614, %v1647
      %v1679 = vadd.f32 %v1615, %v1647
      %v1680 = vadd.f32 %v1616, %v1647
      %v1681 = vadd.f32 %v1521, %v1649
      %v1682 = vadd.f32 %v1522, %v1650
      %v1683 = vadd.f32 %v1523, %v1651
      %v1684 = vadd.f32 %v1524, %v1652
      %v1685 = vadd.f32 %v1525, %v1653
      %v1686 = vadd.f32 %v1526, %v1654
      %v1687 = vadd.f32 %v1527, %v1655
      %v1688 = vadd.f32 %v1528, %v1656
      %v1689 = vadd.f32 %v1529, %v1657
      %v1690 = vadd.f32 %v1530, %v1658
      %v1691 = vadd.f32 %v1531, %v1659
      %v1692 = vadd.f32 %v1532, %v1660
      %v1693 = vadd.f32 %v1533, %v1661
      %v1694 = vadd.f32 %v1534, %v1662
      %v1695 = vadd.f32 %v1535, %v1663
      %v1696 = vadd.f32 %v1536, %v1664
      %v1697 = vadd.f32 %v1537, %v1665
      %v1698 = vadd.f32 %v1538, %v1666
      %v1699 = vadd.f32 %v1539, %v1667
      %v1700 = vadd.f32 %v1540, %v1668
      %v1701 = vadd.f32 %v1541, %v1669
      %v1702 = vadd.f32 %v1542, %v1670
      %v1703 = vadd.f32 %v1543, %v1671
      %v1704 = vadd.f32 %v1544, %v1672
      %v1705 = vadd.f32 %v1545, %v1673
      %v1706 = vadd.f32 %v1546, %v1674
      %v1707 = vadd.f32 %v1547, %v1675
      %v1708 = vadd.f32 %v1548, %v1676
      %v1709 = vadd.f32 %v1549, %v1677
      %v1710 = vadd.f32 %v1550, %v1678
      %v1711 = vadd.f32 %v1551, %v1679
      %v1712 = vadd.f32 %v1552, %v1680
      %v1713 = vmax.f32 %v1681, 0.0
      %v1714 = vmax.f32 %v1682, 0.0
      %v1715 = vmax.f32 %v1683, 0.0
      %v1716 = vmax.f32 %v1684, 0.0
      %v1717 = vmax.f32 %v1685, 0.0
      %v1718 = vmax.f32 %v1686, 0.0
      %v1719 = vmax.f32 %v1687, 0.0
      %v1720 = vmax.f32 %v1688, 0.0
      %v1721 = vmax.f32 %v1689, 0.0
      %v1722 = vmax.f32 %v1690, 0.0
      %v1723 = vmax.f32 %v1691, 0.0
      %v1724 = vmax.f32 %v1692, 0.0
      %v1725 = vmax.f32 %v1693, 0.0
      %v1726 = vmax.f32 %v1694, 0.0
      %v1727 = vmax.f32 %v1695, 0.0
      %v1728 = vmax.f32 %v1696, 0.0
      %v1729 = vmax.f32 %v1697, 0.0
      %v1730 = vmax.f32 %v1698, 0.0
      %v1731 = vmax.f32 %v1699, 0.0
      %v1732 = vmax.f32 %v1700, 0.0
      %v1733 = vmax.f32 %v1701, 0.0
      %v1734 = vmax.f32 %v1702, 0.0
      %v1735 = vmax.f32 %v1703, 0.0
      %v1736 = vmax.f32 %v1704, 0.0
      %v1737 = vmax.f32 %v1705, 0.0
      %v1738 = vmax.f32 %v1706, 0.0
      %v1739 = vmax.f32 %v1707, 0.0
      %v1740 = vmax.f32 %v1708, 0.0
      %v1741 = vmax.f32 %v1709, 0.0
      %v1742 = vmax.f32 %v1710, 0.0
      %v1743 = vmax.f32 %v1711, 0.0
      %v1744 = vmax.f32 %v1712, 0.0
      %s1745 = scalar_lea.vmem %s2, 96
      %v1746 = vld [vmem:[%s1745] sm:$0xf]
      %v1747 = vld [vmem:[%s1745 + $0x4] sm:$0xf]
      %v1748 = vld [vmem:[%s1745 + $0x8] sm:$0xf]
      %v1749 = vld [vmem:[%s1745 + $0xc] sm:$0xf]
      %v1750 = vld [vmem:[%s1745 + $0x10] sm:$0xf]
      %v1751 = vld [vmem:[%s1745 + $0x14] sm:$0xf]
      %v1752 = vld [vmem:[%s1745 + $0x18] sm:$0xf]
      %v1753 = vld [vmem:[%s1745 + $0x1c] sm:$0xf]
      %v1754 = vpack.c.bf16 %v1717, %v1713
      %v1755 = vpack.c.bf16 %v1718, %v1714
      %v1756 = vpack.c.bf16 %v1719, %v1715
      %v1757 = vpack.c.bf16 %v1720, %v1716
      %v1758 = vpack.c.bf16 %v1725, %v1721
      %v1759 = vpack.c.bf16 %v1726, %v1722
      %v1760 = vpack.c.bf16 %v1727, %v1723
      %v1761 = vpack.c.bf16 %v1728, %v1724
      %v1762 = vpack.c.bf16 %v1733, %v1729
      %v1763 = vpack.c.bf16 %v1734, %v1730
      %v1764 = vpack.c.bf16 %v1735, %v1731
      %v1765 = vpack.c.bf16 %v1736, %v1732
      %v1766 = vpack.c.bf16 %v1741, %v1737
      %v1767 = vpack.c.bf16 %v1742, %v1738
      %v1768 = vpack.c.bf16 %v1743, %v1739
      %v1769 = vpack.c.bf16 %v1744, %v1740
      %1770 = vset.pattern.permute.xlu0 11
      %1771 = vperm.xlu0 %1770, %v171
      %v1772 = vpop.permute.xlu0 %1771
      %1774 = vset.pattern.permute.xlu0 11
      %1775 = vperm.xlu0 %1774, %v172
      %v1776 = vpop.permute.xlu0 %1775
      %1778 = vset.pattern.permute.xlu0 11
      %1779 = vperm.xlu0 %1778, %v173
      %v1780 = vpop.permute.xlu0 %1779
      %1782 = vset.pattern.permute.xlu0 11
      %1783 = vperm.xlu0 %1782, %v174
      %v1784 = vpop.permute.xlu0 %1783
      %1786 = vset.pattern.permute.xlu0 11
      %1787 = vperm.xlu0 %1786, %v175
      %v1788 = vpop.permute.xlu0 %1787
      %1790 = vset.pattern.permute.xlu0 11
      %1791 = vperm.xlu0 %1790, %v176
      %v1792 = vpop.permute.xlu0 %1791
      %1794 = vset.pattern.permute.xlu0 11
      %1795 = vperm.xlu0 %1794, %v177
      %v1796 = vpop.permute.xlu0 %1795
      %1798 = vset.pattern.permute.xlu0 11
      %1799 = vperm.xlu0 %1798, %v178
      %v1800 = vpop.permute.xlu0 %1799
      %v1810 = vunpack.c.l.b16 %v1746
      %v1811 = vunpack.c.l.b16 %v1747
      %v1812 = vunpack.c.l.b16 %v1748
      %v1813 = vunpack.c.l.b16 %v1749
      %v1814 = vunpack.c.l.b16 %v1750
      %v1815 = vunpack.c.l.b16 %v1751
      %v1816 = vunpack.c.l.b16 %v1752
      %v1817 = vunpack.c.l.b16 %v1753
      %v1818 = vpack.c.b16 %v1811, %v1810
      %v1819 = vpack.c.b16 %v1813, %v1812
      %v1820 = vpack.c.b16 %v1815, %v1814
      %v1821 = vpack.c.b16 %v1817, %v1816
      %v1823 = vsel %vm444, %v1818, 0
      %v1826 = vsel %vm444, %v1819, 0
      %v1829 = vsel %vm444, %v1820, 0
      %v1832 = vsel %vm444, %v1821, 0
      %1834 = vmatprep.subr.bf16.mxu0 0
      %1835 = vmatpush1.bf16.msra.mxu0 0
      %1836 = vmatprep.subr.bf16.mxu0 0
      %1837 = vmatpush1.bf16.msra.mxu0 0
      %1838 = vmatprep.subr.bf16.mxu0 0
      %1839 = vmatpush1.bf16.msra.mxu0 0
      %1840 = vmatprep.subr.bf16.mxu0 0
      %1841 = vmatpush1.bf16.msra.mxu0 0
      %1842 = vmatprep.subr.bf16.mxu0 %v1767
      %1843 = vmatpush1.bf16.msra.mxu0 %v1766
      %1844 = vmatprep.subr.bf16.mxu0 %v1763
      %1845 = vmatpush1.bf16.msra.mxu0 %v1762
      %1846 = vmatprep.subr.bf16.mxu0 %v1759
      %1847 = vmatpush1.bf16.msra.mxu0 %v1758
      %1848 = vmatprep.subr.bf16.mxu0 %v1755
      %1849 = vmatpush1.bf16.msra.mxu0 %v1754
      %1850 = vmatprep.subr.bf16.mxu0 0
      %1851 = vmatpush2.bf16.msra.mxu0 0
      %1852 = vmatprep.subr.bf16.mxu0 0
      %1853 = vmatpush2.bf16.msra.mxu0 0
      %1854 = vmatprep.subr.bf16.mxu0 0
      %1855 = vmatpush2.bf16.msra.mxu0 0
      %1856 = vmatprep.subr.bf16.mxu0 0
      %1857 = vmatpush2.bf16.msra.mxu0 0
      %1858 = vmatprep.subr.bf16.mxu0 0
      %1859 = vmatpush2.bf16.msra.mxu0 0
      %1860 = vmatprep.subr.bf16.mxu0 0
      %1861 = vmatpush2.bf16.msra.mxu0 0
      %1862 = vmatprep.subr.bf16.mxu0 0
      %1863 = vmatpush2.bf16.msra.mxu0 0
      %1864 = vmatprep.subr.bf16.mxu0 0
      %1865 = vmatpush2.bf16.msra.mxu0 0
      %1866 = vmatprep.mubr.bf16.mxu0 0
      %1867 = vmatmul.mubr.bf16.gmra.mxu0 %v1823
      %v1868 = vpop.f32.mrf.mxu0
      %v1869 = vadd.f32 %v1772, %v1868
      %v1870 = vpop.f32.mrf.mxu0
      %v1871 = vadd.f32 %v1772, %v1870
      %v1872 = vpop.f32.mrf.mxu0
      %v1873 = vadd.f32 %v1776, %v1872
      %v1874 = vpop.f32.mrf.mxu0
      %v1875 = vadd.f32 %v1776, %v1874
      %1876 = vmatprep.mubr.bf16.mxu0 0
      %1877 = vmatmul.mubr.bf16.gmra.mxu0 %v1826
      %v1878 = vpop.f32.mrf.mxu0
      %v1879 = vadd.f32 %v1780, %v1878
      %v1880 = vpop.f32.mrf.mxu0
      %v1881 = vadd.f32 %v1780, %v1880
      %v1882 = vpop.f32.mrf.mxu0
      %v1883 = vadd.f32 %v1784, %v1882
      %v1884 = vpop.f32.mrf.mxu0
      %v1885 = vadd.f32 %v1784, %v1884
      %1886 = vmatprep.mubr.bf16.mxu0 0
      %1887 = vmatmul.mubr.bf16.gmra.mxu0 %v1829
      %v1888 = vpop.f32.mrf.mxu0
      %v1889 = vadd.f32 %v1788, %v1888
      %v1890 = vpop.f32.mrf.mxu0
      %v1891 = vadd.f32 %v1788, %v1890
      %v1892 = vpop.f32.mrf.mxu0
      %v1893 = vadd.f32 %v1792, %v1892
      %v1894 = vpop.f32.mrf.mxu0
      %v1895 = vadd.f32 %v1792, %v1894
      %1896 = vmatprep.mubr.bf16.mxu0 0
      %1897 = vmatmul.mubr.bf16.gmra.mxu0 %v1832
      %v1898 = vpop.f32.mrf.mxu0
      %v1899 = vadd.f32 %v1796, %v1898
      %v1900 = vpop.f32.mrf.mxu0
      %v1901 = vadd.f32 %v1796, %v1900
      %v1902 = vpop.f32.mrf.mxu0
      %v1903 = vadd.f32 %v1800, %v1902
      %v1904 = vpop.f32.mrf.mxu0
      %v1905 = vadd.f32 %v1800, %v1904
      %1906 = vdwg.mxu0
      %1907 = vmatprep.subr.bf16.mxu0 0
      %1908 = vmatpush1.bf16.msra.mxu0 0
      %1909 = vmatprep.subr.bf16.mxu0 0
      %1910 = vmatpush1.bf16.msra.mxu0 0
      %1911 = vmatprep.subr.bf16.mxu0 0
      %1912 = vmatpush1.bf16.msra.mxu0 0
      %1913 = vmatprep.subr.bf16.mxu0 0
      %1914 = vmatpush1.bf16.msra.mxu0 0
      %1915 = vmatprep.subr.bf16.mxu0 %v1769
      %1916 = vmatpush1.bf16.msra.mxu0 %v1768
      %1917 = vmatprep.subr.bf16.mxu0 %v1765
      %1918 = vmatpush1.bf16.msra.mxu0 %v1764
      %1919 = vmatprep.subr.bf16.mxu0 %v1761
      %1920 = vmatpush1.bf16.msra.mxu0 %v1760
      %1921 = vmatprep.subr.bf16.mxu0 %v1757
      %1922 = vmatpush1.bf16.msra.mxu0 %v1756
      %1923 = vmatprep.subr.bf16.mxu0 0
      %1924 = vmatpush2.bf16.msra.mxu0 0
      %1925 = vmatprep.subr.bf16.mxu0 0
      %1926 = vmatpush2.bf16.msra.mxu0 0
      %1927 = vmatprep.subr.bf16.mxu0 0
      %1928 = vmatpush2.bf16.msra.mxu0 0
      %1929 = vmatprep.subr.bf16.mxu0 0
      %1930 = vmatpush2.bf16.msra.mxu0 0
      %1931 = vmatprep.subr.bf16.mxu0 0
      %1932 = vmatpush2.bf16.msra.mxu0 0
      %1933 = vmatprep.subr.bf16.mxu0 0
      %1934 = vmatpush2.bf16.msra.mxu0 0
      %1935 = vmatprep.subr.bf16.mxu0 0
      %1936 = vmatpush2.bf16.msra.mxu0 0
      %1937 = vmatprep.subr.bf16.mxu0 0
      %1938 = vmatpush2.bf16.msra.mxu0 0
      %1939 = vmatprep.mubr.bf16.mxu0 0
      %1940 = vmatmul.mubr.bf16.gmra.mxu0 %v1823
      %v1941 = vpop.f32.mrf.mxu0
      %v1942 = vadd.f32 %v1772, %v1941
      %v1943 = vpop.f32.mrf.mxu0
      %v1944 = vadd.f32 %v1772, %v1943
      %v1945 = vpop.f32.mrf.mxu0
      %v1946 = vadd.f32 %v1776, %v1945
      %v1947 = vpop.f32.mrf.mxu0
      %v1948 = vadd.f32 %v1776, %v1947
      %1949 = vmatprep.mubr.bf16.mxu0 0
      %1950 = vmatmul.mubr.bf16.gmra.mxu0 %v1826
      %v1951 = vpop.f32.mrf.mxu0
      %v1952 = vadd.f32 %v1780, %v1951
      %v1953 = vpop.f32.mrf.mxu0
      %v1954 = vadd.f32 %v1780, %v1953
      %v1955 = vpop.f32.mrf.mxu0
      %v1956 = vadd.f32 %v1784, %v1955
      %v1957 = vpop.f32.mrf.mxu0
      %v1958 = vadd.f32 %v1784, %v1957
      %1959 = vmatprep.mubr.bf16.mxu0 0
      %1960 = vmatmul.mubr.bf16.gmra.mxu0 %v1829
      %v1961 = vpop.f32.mrf.mxu0
      %v1962 = vadd.f32 %v1788, %v1961
      %v1963 = vpop.f32.mrf.mxu0
      %v1964 = vadd.f32 %v1788, %v1963
      %v1965 = vpop.f32.mrf.mxu0
      %v1966 = vadd.f32 %v1792, %v1965
      %v1967 = vpop.f32.mrf.mxu0
      %v1968 = vadd.f32 %v1792, %v1967
      %1969 = vmatprep.mubr.bf16.mxu0 0
      %1970 = vmatmul.mubr.bf16.gmra.mxu0 %v1832
      %v1971 = vpop.f32.mrf.mxu0
      %v1972 = vadd.f32 %v1796, %v1971
      %v1973 = vpop.f32.mrf.mxu0
      %v1974 = vadd.f32 %v1796, %v1973
      %v1975 = vpop.f32.mrf.mxu0
      %v1976 = vadd.f32 %v1800, %v1975
      %v1977 = vpop.f32.mrf.mxu0
      %v1978 = vadd.f32 %v1800, %v1977
      %1979 = vdwg.mxu0
      %v1980 = vmax.f32 %v1869, 0.0
      %v1981 = vmax.f32 %v1871, 0.0
      %v1982 = vmax.f32 %v1942, 0.0
      %v1983 = vmax.f32 %v1944, 0.0
      %v1984 = vmax.f32 %v1873, 0.0
      %v1985 = vmax.f32 %v1875, 0.0
      %v1986 = vmax.f32 %v1946, 0.0
      %v1987 = vmax.f32 %v1948, 0.0
      %v1988 = vmax.f32 %v1879, 0.0
      %v1989 = vmax.f32 %v1881, 0.0
      %v1990 = vmax.f32 %v1952, 0.0
      %v1991 = vmax.f32 %v1954, 0.0
      %v1992 = vmax.f32 %v1883, 0.0
      %v1993 = vmax.f32 %v1885, 0.0
      %v1994 = vmax.f32 %v1956, 0.0
      %v1995 = vmax.f32 %v1958, 0.0
      %v1996 = vmax.f32 %v1889, 0.0
      %v1997 = vmax.f32 %v1891, 0.0
      %v1998 = vmax.f32 %v1962, 0.0
      %v1999 = vmax.f32 %v1964, 0.0
      %v2000 = vmax.f32 %v1893, 0.0
      %v2001 = vmax.f32 %v1895, 0.0
      %v2002 = vmax.f32 %v1966, 0.0
      %v2003 = vmax.f32 %v1968, 0.0
      %v2004 = vmax.f32 %v1899, 0.0
      %v2005 = vmax.f32 %v1901, 0.0
      %v2006 = vmax.f32 %v1972, 0.0
      %v2007 = vmax.f32 %v1974, 0.0
      %v2008 = vmax.f32 %v1903, 0.0
      %v2009 = vmax.f32 %v1905, 0.0
      %v2010 = vmax.f32 %v1976, 0.0
      %v2011 = vmax.f32 %v1978, 0.0
      %2012 = vset.pattern.permute.xlu0 12
      %2013 = vperm.xlu0 %2012, %v171
      %v2014 = vpop.permute.xlu0 %2013
      %2016 = vset.pattern.permute.xlu0 12
      %2017 = vperm.xlu0 %2016, %v172
      %v2018 = vpop.permute.xlu0 %2017
      %2020 = vset.pattern.permute.xlu0 12
      %2021 = vperm.xlu0 %2020, %v173
      %v2022 = vpop.permute.xlu0 %2021
      %2024 = vset.pattern.permute.xlu0 12
      %2025 = vperm.xlu0 %2024, %v174
      %v2026 = vpop.permute.xlu0 %2025
      %2028 = vset.pattern.permute.xlu0 12
      %2029 = vperm.xlu0 %2028, %v175
      %v2030 = vpop.permute.xlu0 %2029
      %2032 = vset.pattern.permute.xlu0 12
      %2033 = vperm.xlu0 %2032, %v176
      %v2034 = vpop.permute.xlu0 %2033
      %2036 = vset.pattern.permute.xlu0 12
      %2037 = vperm.xlu0 %2036, %v177
      %v2038 = vpop.permute.xlu0 %2037
      %2040 = vset.pattern.permute.xlu0 12
      %2041 = vperm.xlu0 %2040, %v178
      %v2042 = vpop.permute.xlu0 %2041
      %v2044 = vmul.f32 %v2014, %v183
      %v2045 = vmul.f32 %v2014, %v187
      %v2046 = vmul.f32 %v2014, %v191
      %v2047 = vmul.f32 %v2014, %v195
      %v2048 = vmul.f32 %v2018, %v183
      %v2049 = vmul.f32 %v2018, %v187
      %v2050 = vmul.f32 %v2018, %v191
      %v2051 = vmul.f32 %v2018, %v195
      %v2052 = vmul.f32 %v2022, %v183
      %v2053 = vmul.f32 %v2022, %v187
      %v2054 = vmul.f32 %v2022, %v191
      %v2055 = vmul.f32 %v2022, %v195
      %v2056 = vmul.f32 %v2026, %v183
      %v2057 = vmul.f32 %v2026, %v187
      %v2058 = vmul.f32 %v2026, %v191
      %v2059 = vmul.f32 %v2026, %v195
      %v2060 = vmul.f32 %v2030, %v183
      %v2061 = vmul.f32 %v2030, %v187
      %v2062 = vmul.f32 %v2030, %v191
      %v2063 = vmul.f32 %v2030, %v195
      %v2064 = vmul.f32 %v2034, %v183
      %v2065 = vmul.f32 %v2034, %v187
      %v2066 = vmul.f32 %v2034, %v191
      %v2067 = vmul.f32 %v2034, %v195
      %v2068 = vmul.f32 %v2038, %v183
      %v2069 = vmul.f32 %v2038, %v187
      %v2070 = vmul.f32 %v2038, %v191
      %v2071 = vmul.f32 %v2038, %v195
      %v2072 = vmul.f32 %v2042, %v183
      %v2073 = vmul.f32 %v2042, %v187
      %v2074 = vmul.f32 %v2042, %v191
      %v2075 = vmul.f32 %v2042, %v195
      %2076 = vset.pattern.permute.xlu0 13
      %2077 = vperm.xlu0 %2076, %v171
      %v2078 = vpop.permute.xlu0 %2077
      %2080 = vset.pattern.permute.xlu0 13
      %2081 = vperm.xlu0 %2080, %v172
      %v2082 = vpop.permute.xlu0 %2081
      %2084 = vset.pattern.permute.xlu0 13
      %2085 = vperm.xlu0 %2084, %v173
      %v2086 = vpop.permute.xlu0 %2085
      %2088 = vset.pattern.permute.xlu0 13
      %2089 = vperm.xlu0 %2088, %v174
      %v2090 = vpop.permute.xlu0 %2089
      %2092 = vset.pattern.permute.xlu0 13
      %2093 = vperm.xlu0 %2092, %v175
      %v2094 = vpop.permute.xlu0 %2093
      %2096 = vset.pattern.permute.xlu0 13
      %2097 = vperm.xlu0 %2096, %v176
      %v2098 = vpop.permute.xlu0 %2097
      %2100 = vset.pattern.permute.xlu0 13
      %2101 = vperm.xlu0 %2100, %v177
      %v2102 = vpop.permute.xlu0 %2101
      %2104 = vset.pattern.permute.xlu0 13
      %2105 = vperm.xlu0 %2104, %v178
      %v2106 = vpop.permute.xlu0 %2105
      %v2108 = vadd.f32 %v2044, %v2078
      %v2109 = vadd.f32 %v2045, %v2078
      %v2110 = vadd.f32 %v2046, %v2078
      %v2111 = vadd.f32 %v2047, %v2078
      %v2112 = vadd.f32 %v2048, %v2082
      %v2113 = vadd.f32 %v2049, %v2082
      %v2114 = vadd.f32 %v2050, %v2082
      %v2115 = vadd.f32 %v2051, %v2082
      %v2116 = vadd.f32 %v2052, %v2086
      %v2117 = vadd.f32 %v2053, %v2086
      %v2118 = vadd.f32 %v2054, %v2086
      %v2119 = vadd.f32 %v2055, %v2086
      %v2120 = vadd.f32 %v2056, %v2090
      %v2121 = vadd.f32 %v2057, %v2090
      %v2122 = vadd.f32 %v2058, %v2090
      %v2123 = vadd.f32 %v2059, %v2090
      %v2124 = vadd.f32 %v2060, %v2094
      %v2125 = vadd.f32 %v2061, %v2094
      %v2126 = vadd.f32 %v2062, %v2094
      %v2127 = vadd.f32 %v2063, %v2094
      %v2128 = vadd.f32 %v2064, %v2098
      %v2129 = vadd.f32 %v2065, %v2098
      %v2130 = vadd.f32 %v2066, %v2098
      %v2131 = vadd.f32 %v2067, %v2098
      %v2132 = vadd.f32 %v2068, %v2102
      %v2133 = vadd.f32 %v2069, %v2102
      %v2134 = vadd.f32 %v2070, %v2102
      %v2135 = vadd.f32 %v2071, %v2102
      %v2136 = vadd.f32 %v2072, %v2106
      %v2137 = vadd.f32 %v2073, %v2106
      %v2138 = vadd.f32 %v2074, %v2106
      %v2139 = vadd.f32 %v2075, %v2106
      %v2140 = vadd.f32 %v1980, %v2108
      %v2141 = vadd.f32 %v1981, %v2109
      %v2142 = vadd.f32 %v1982, %v2110
      %v2143 = vadd.f32 %v1983, %v2111
      %v2144 = vadd.f32 %v1984, %v2112
      %v2145 = vadd.f32 %v1985, %v2113
      %v2146 = vadd.f32 %v1986, %v2114
      %v2147 = vadd.f32 %v1987, %v2115
      %v2148 = vadd.f32 %v1988, %v2116
      %v2149 = vadd.f32 %v1989, %v2117
      %v2150 = vadd.f32 %v1990, %v2118
      %v2151 = vadd.f32 %v1991, %v2119
      %v2152 = vadd.f32 %v1992, %v2120
      %v2153 = vadd.f32 %v1993, %v2121
      %v2154 = vadd.f32 %v1994, %v2122
      %v2155 = vadd.f32 %v1995, %v2123
      %v2156 = vadd.f32 %v1996, %v2124
      %v2157 = vadd.f32 %v1997, %v2125
      %v2158 = vadd.f32 %v1998, %v2126
      %v2159 = vadd.f32 %v1999, %v2127
      %v2160 = vadd.f32 %v2000, %v2128
      %v2161 = vadd.f32 %v2001, %v2129
      %v2162 = vadd.f32 %v2002, %v2130
      %v2163 = vadd.f32 %v2003, %v2131
      %v2164 = vadd.f32 %v2004, %v2132
      %v2165 = vadd.f32 %v2005, %v2133
      %v2166 = vadd.f32 %v2006, %v2134
      %v2167 = vadd.f32 %v2007, %v2135
      %v2168 = vadd.f32 %v2008, %v2136
      %v2169 = vadd.f32 %v2009, %v2137
      %v2170 = vadd.f32 %v2010, %v2138
      %v2171 = vadd.f32 %v2011, %v2139
      %v2172 = vmax.f32 %v2140, 0.0
      %v2173 = vmax.f32 %v2141, 0.0
      %v2174 = vmax.f32 %v2142, 0.0
      %v2175 = vmax.f32 %v2143, 0.0
      %v2176 = vmax.f32 %v2144, 0.0
      %v2177 = vmax.f32 %v2145, 0.0
      %v2178 = vmax.f32 %v2146, 0.0
      %v2179 = vmax.f32 %v2147, 0.0
      %v2180 = vmax.f32 %v2148, 0.0
      %v2181 = vmax.f32 %v2149, 0.0
      %v2182 = vmax.f32 %v2150, 0.0
      %v2183 = vmax.f32 %v2151, 0.0
      %v2184 = vmax.f32 %v2152, 0.0
      %v2185 = vmax.f32 %v2153, 0.0
      %v2186 = vmax.f32 %v2154, 0.0
      %v2187 = vmax.f32 %v2155, 0.0
      %v2188 = vmax.f32 %v2156, 0.0
      %v2189 = vmax.f32 %v2157, 0.0
      %v2190 = vmax.f32 %v2158, 0.0
      %v2191 = vmax.f32 %v2159, 0.0
      %v2192 = vmax.f32 %v2160, 0.0
      %v2193 = vmax.f32 %v2161, 0.0
      %v2194 = vmax.f32 %v2162, 0.0
      %v2195 = vmax.f32 %v2163, 0.0
      %v2196 = vmax.f32 %v2164, 0.0
      %v2197 = vmax.f32 %v2165, 0.0
      %v2198 = vmax.f32 %v2166, 0.0
      %v2199 = vmax.f32 %v2167, 0.0
      %v2200 = vmax.f32 %v2168, 0.0
      %v2201 = vmax.f32 %v2169, 0.0
      %v2202 = vmax.f32 %v2170, 0.0
      %v2203 = vmax.f32 %v2171, 0.0
      %2204 = vset.pattern.permute.xlu0 14
      %2205 = vperm.xlu0 %2204, %v171
      %v2206 = vpop.permute.xlu0 %2205
      %2208 = vset.pattern.permute.xlu0 14
      %2209 = vperm.xlu0 %2208, %v172
      %v2210 = vpop.permute.xlu0 %2209
      %2212 = vset.pattern.permute.xlu0 14
      %2213 = vperm.xlu0 %2212, %v173
      %v2214 = vpop.permute.xlu0 %2213
      %2216 = vset.pattern.permute.xlu0 14
      %2217 = vperm.xlu0 %2216, %v174
      %v2218 = vpop.permute.xlu0 %2217
      %2220 = vset.pattern.permute.xlu0 14
      %2221 = vperm.xlu0 %2220, %v175
      %v2222 = vpop.permute.xlu0 %2221
      %2224 = vset.pattern.permute.xlu0 14
      %2225 = vperm.xlu0 %2224, %v176
      %v2226 = vpop.permute.xlu0 %2225
      %2228 = vset.pattern.permute.xlu0 14
      %2229 = vperm.xlu0 %2228, %v177
      %v2230 = vpop.permute.xlu0 %2229
      %2232 = vset.pattern.permute.xlu0 14
      %2233 = vperm.xlu0 %2232, %v178
      %v2234 = vpop.permute.xlu0 %2233
      %v2236 = vmul.f32 %v2172, %v2206
      %v2237 = vmul.f32 %v2173, %v2206
      %v2238 = vmul.f32 %v2174, %v2206
      %v2239 = vmul.f32 %v2175, %v2206
      %v2240 = vmul.f32 %v2176, %v2210
      %v2241 = vmul.f32 %v2177, %v2210
      %v2242 = vmul.f32 %v2178, %v2210
      %v2243 = vmul.f32 %v2179, %v2210
      %v2244 = vmul.f32 %v2180, %v2214
      %v2245 = vmul.f32 %v2181, %v2214
      %v2246 = vmul.f32 %v2182, %v2214
      %v2247 = vmul.f32 %v2183, %v2214
      %v2248 = vmul.f32 %v2184, %v2218
      %v2249 = vmul.f32 %v2185, %v2218
      %v2250 = vmul.f32 %v2186, %v2218
      %v2251 = vmul.f32 %v2187, %v2218
      %v2252 = vmul.f32 %v2188, %v2222
      %v2253 = vmul.f32 %v2189, %v2222
      %v2254 = vmul.f32 %v2190, %v2222
      %v2255 = vmul.f32 %v2191, %v2222
      %v2256 = vmul.f32 %v2192, %v2226
      %v2257 = vmul.f32 %v2193, %v2226
      %v2258 = vmul.f32 %v2194, %v2226
      %v2259 = vmul.f32 %v2195, %v2226
      %v2260 = vmul.f32 %v2196, %v2230
      %v2261 = vmul.f32 %v2197, %v2230
      %v2262 = vmul.f32 %v2198, %v2230
      %v2263 = vmul.f32 %v2199, %v2230
      %v2264 = vmul.f32 %v2200, %v2234
      %v2265 = vmul.f32 %v2201, %v2234
      %v2266 = vmul.f32 %v2202, %v2234
      %v2267 = vmul.f32 %v2203, %v2234
      %v2268 = vadd.f32 %v2236, %v2240
      %v2269 = vadd.f32 %v2268, %v2244
      %v2270 = vadd.f32 %v2269, %v2248
      %v2271 = vadd.f32 %v2270, %v2252
      %v2272 = vadd.f32 %v2271, %v2256
      %v2273 = vadd.f32 %v2272, %v2260
      %v2274 = vadd.f32 %v2273, %v2264
      %v2275 = vrot.slane %v2274, 4
      %v2276 = vadd.f32 %v2274, %v2275
      %v2277 = vrot.slane %v2276, 2
      %v2278 = vadd.f32 %v2276, %v2277
      %v2279 = vrot.slane %v2278, 1
      %v2280 = vadd.f32 %v2278, %v2279
      %v2281 = vadd.f32 %v2237, %v2241
      %v2282 = vadd.f32 %v2281, %v2245
      %v2283 = vadd.f32 %v2282, %v2249
      %v2284 = vadd.f32 %v2283, %v2253
      %v2285 = vadd.f32 %v2284, %v2257
      %v2286 = vadd.f32 %v2285, %v2261
      %v2287 = vadd.f32 %v2286, %v2265
      %v2288 = vrot.slane %v2287, 4
      %v2289 = vadd.f32 %v2287, %v2288
      %v2290 = vrot.slane %v2289, 2
      %v2291 = vadd.f32 %v2289, %v2290
      %v2292 = vrot.slane %v2291, 1
      %v2293 = vadd.f32 %v2291, %v2292
      %v2294 = vadd.f32 %v2238, %v2242
      %v2295 = vadd.f32 %v2294, %v2246
      %v2296 = vadd.f32 %v2295, %v2250
      %v2297 = vadd.f32 %v2296, %v2254
      %v2298 = vadd.f32 %v2297, %v2258
      %v2299 = vadd.f32 %v2298, %v2262
      %v2300 = vadd.f32 %v2299, %v2266
      %v2301 = vrot.slane %v2300, 4
      %v2302 = vadd.f32 %v2300, %v2301
      %v2303 = vrot.slane %v2302, 2
      %v2304 = vadd.f32 %v2302, %v2303
      %v2305 = vrot.slane %v2304, 1
      %v2306 = vadd.f32 %v2304, %v2305
      %v2307 = vadd.f32 %v2239, %v2243
      %v2308 = vadd.f32 %v2307, %v2247
      %v2309 = vadd.f32 %v2308, %v2251
      %v2310 = vadd.f32 %v2309, %v2255
      %v2311 = vadd.f32 %v2310, %v2259
      %v2312 = vadd.f32 %v2311, %v2263
      %v2313 = vadd.f32 %v2312, %v2267
      %v2314 = vrot.slane %v2313, 4
      %v2315 = vadd.f32 %v2313, %v2314
      %v2316 = vrot.slane %v2315, 2
      %v2317 = vadd.f32 %v2315, %v2316
      %v2318 = vrot.slane %v2317, 1
      %v2319 = vadd.f32 %v2317, %v2318
      %2320 = vset.pattern.permute.xlu0 15
      %2321 = vperm.xlu0 %2320, %v171
      %v2322 = vpop.permute.xlu0 %2321
      %v2324 = vadd.f32 %v2280, %v2322
      %v2325 = vadd.f32 %v2293, %v2322
      %v2326 = vadd.f32 %v2306, %v2322
      %v2327 = vadd.f32 %v2319, %v2322
      %v2328 = vmin.f32 %v2324, 0.0
      %v2329 = vmin.f32 %v2325, 0.0
      %v2330 = vmin.f32 %v2326, 0.0
      %v2331 = vmin.f32 %v2327, 0.0
      %2332 = vset.pattern.permute.xlu0 16
      %2333 = vperm.xlu0 %2332, %v171
      %v2334 = vpop.permute.xlu0 %2333
      %v2336 = vmul.f32 %v2334, %v183
      %v2337 = vmul.f32 %v2334, %v187
      %v2338 = vmul.f32 %v2334, %v191
      %v2339 = vmul.f32 %v2334, %v195
      %2340 = vset.pattern.permute.xlu0 17
      %2341 = vperm.xlu0 %2340, %v171
      %v2342 = vpop.permute.xlu0 %2341
      %v2344 = vadd.f32 %v2336, %v2342
      %v2345 = vadd.f32 %v2337, %v2342
      %v2346 = vadd.f32 %v2338, %v2342
      %v2347 = vadd.f32 %v2339, %v2342
      %v2348 = vadd.f32 %v2328, %v2344
      %v2349 = vadd.f32 %v2329, %v2345
      %v2350 = vadd.f32 %v2330, %v2346
      %v2351 = vadd.f32 %v2331, %v2347
      %v2356 = vcombine.low %v2348, %v2349
      %v2357 = vcombine.low %v2350, %v2351
      %v2359 = vunpack.c.l.s4 1966171168
      %v2360 = vunpack.c.0.s8 %v2359
      %v2361 = vlaneseq
      %v2362 = vshrl.u32 %v2361, 7
      %v2363 = vsub.s32 %v2360, %v2362
      %v2364 = vrot.slane %v2356, %v2363
      %v2366 = vunpack.c.l.s4 1966171168
      %v2367 = vunpack.c.0.s8 %v2366
      %v2368 = vlaneseq
      %v2369 = vshrl.u32 %v2368, 7
      %v2370 = vsub.s32 %v2367, %v2369
      %v2371 = vrot.slane %v2357, %v2370
      %v2372 = vcombine.low %v2364, %v2371
      %v2374 = vunpack.c.l.s4 1966171168
      %v2375 = vunpack.c.0.s8 %v2374
      %v2376 = vlaneseq
      %v2377 = vshrl.u32 %v2376, 7
      %v2378 = vsub.s32 %v2375, %v2377
      %v2379 = vrot.slane %v2372, %v2378
      %v2381 = vlaneseq
      %vm2382 = vcmp.ge.s32.totalorder %v2381, 0
      %vm2383 = vcmp.lt.s32.totalorder %v2381, 512
      %vm2384 = vmand %vm2382, %vm2383
      %2385 = vst.msk [vmem:[%s167] sm:$0xf] %vm2384, %v2379
      %s2386 = smul.u32 4, %s14
      %p2387 = scmp.lt.s32.totalorder %s2386, 7
      %s2388 = scalar_select %p2387, %s2386, 7
      %s2389 = scalar_lea.vmem %s3, %s2388
      // Predicated region
      $region33: #{icnn_forward.1} parent=31 // pred_check
        %p2390 = pneg %p100
      $region34: #{icnn_forward.1} parent=31 // pred_check_branch
        %2392 = sbr.rel (%p2390) target = $region36
      $region35: #{icnn_forward.1} parent=31 // pred_region
        %s2393 = smul.u32 4, %s14
      $region36: #{icnn_forward.1} parent=31 // pred_fallthru
        _
    $region32: #{icnn_forward.1} parent=5 // pred_fallthru
      _
    %p2394 = scmp.le.s32.totalorder 2, %s9
    // Predicated region
    $region37: #{icnn_forward.1} parent=5 // pred_check
      %p2395 = pneg %p2394
    $region38: #{icnn_forward.1} parent=5 // pred_check_branch
      %2397 = sbr.rel (%p2395) target = $region40
    $region39: #{icnn_forward.1} parent=5 // pred_region
      %s2398 = ssub.s32 %s9, 2
      // Predicated region
      $region41: #{icnn_forward.1} parent=39 // pred_check
        %p2399 = pneg %p106
      $region42: #{icnn_forward.1} parent=39 // pred_check_branch
        %2401 = sbr.rel (%p2399) target = $region44
      $region43: #{icnn_forward.1} parent=39 // pred_region
        %s2402 = smul.u32 4, %s15
        %p2403 = scmp.lt.s32.totalorder %s2402, 7
        %s2404 = scalar_select %p2403, %s2402, 7
        %s2405 = scalar_lea.vmem %s3, %s2404
      $region44: #{icnn_forward.1} parent=39 // pred_fallthru
        _
    $region40: #{icnn_forward.1} parent=5 // pred_fallthru
      _
  $region6: #{icnn_forward.1} parent=0 // loop_footer
    %s13 = sadd.s32 1, %s9
  $region7: #{icnn_forward.1} parent=0 // loop_footer_branch
    %8 = sbr.rel target = $region3
  $region8: #{icnn_forward.1} parent=0 // loop_exit
    _

</llo_original>
